<compile_context>
chip_gen: v7x
topology: tpu7x:2x2x1
jax: 0.10.0
libtpu: 0.0.40
codegen_flags: <defaults>
</compile_context>

<pallas_src>
import jax
import jax.numpy as jnp
from jax.experimental import pallas as pl
from jax.experimental.pallas import tpu as pltpu


def stem_fused_kernel(xd_ref, w_ref, scale_ref, shift_ref, out_ref, rowmax_ref):
    """Fused conv7x7/s2 (im2col in VMEM) + BN + ReLU + maxpool3x3/s2 for one image.

    xd_ref:     (1, OH+3, OW+3, 16) bf16  space-to-depth packed, spatially padded input
    w_ref:      (256, 64)           bf16  rearranged conv weights (K = 4*4*16)
    scale_ref:  (1, 64)             f32   folded BatchNorm scale
    shift_ref:  (1, 64)             f32   folded BatchNorm shift (includes conv bias)
    out_ref:    (1, POH, POW, 64)   f32   pooled output
    rowmax_ref: (POH, OW+1, 64)     f32   scratch for the column pooling stage
    """
    _, hv, wv, c16 = xd_ref.shape
    oh, ow = hv - 3, wv - 3
    _, poh, pow_, cout = out_ref.shape

    # ---- im2col assembled in VMEM: K ordered as (b, a, packed-channel) ----
    taps = [xd_ref[0, b:b + oh, a:a + ow, :] for b in range(4) for a in range(4)]
    patches = jnp.concatenate(taps, axis=-1)              # (OH, OW, 256) bf16
    patches = patches.reshape(oh * ow, 16 * c16)          # (OH*OW, 256)

    # ---- conv as a single MXU matmul (bf16 x bf16 -> f32 accumulation) ----
    y = jnp.dot(patches, w_ref[...], preferred_element_type=jnp.float32)
    # folded eval-mode BatchNorm + ReLU, kept in f32 on the VPU
    y = jnp.maximum(y * scale_ref[...] + shift_ref[...], 0.0)   # (OH*OW, 64)

    # ---- fused 3x3 stride-2 max pool (zero pad == -inf pad since y >= 0 post-ReLU) ----
    # row stage: window rows {2ph-1, 2ph, 2ph+1}
    y4 = y.reshape(poh, 2, ow, cout)
    even_rows = y4[:, 0]                                   # conv rows 2ph
    odd_rows = y4[:, 1]                                    # conv rows 2ph+1
    odd_up = jnp.concatenate(
        [jnp.zeros((1, ow, cout), jnp.float32), odd_rows[:poh - 1]], axis=0)  # 2ph-1
    rmax = jnp.maximum(jnp.maximum(even_rows, odd_rows), odd_up)   # (POH, OW, 64)

    # column stage: stage rmax with one leading zero column, then 3 stride-2 reads
    rowmax_ref[:, 0:1, :] = jnp.zeros((poh, 1, cout), jnp.float32)
    rowmax_ref[:, 1:, :] = rmax
    pooled = rowmax_ref[:, pl.ds(0, pow_, stride=2), :]
    pooled = jnp.maximum(pooled, rowmax_ref[:, pl.ds(1, pow_, stride=2), :])
    pooled = jnp.maximum(pooled, rowmax_ref[:, pl.ds(2, pow_, stride=2), :])
    out_ref[0] = pooled


def init_params(key):
    ks = jax.random.split(key, 6)
    return {
        "w": 0.05 * jax.random.normal(ks[0], (64, 3, 7, 7), jnp.float32),   # OIHW
        "b": 0.01 * jax.random.normal(ks[1], (64,), jnp.float32),
        "gamma": 1.0 + 0.1 * jax.random.normal(ks[2], (64,), jnp.float32),
        "beta": 0.05 * jax.random.normal(ks[3], (64,), jnp.float32),
        "rmean": 0.05 * jax.random.normal(ks[4], (64,), jnp.float32),
        "rvar": jax.random.uniform(ks[5], (64,), jnp.float32, 0.5, 1.5),
    }


@jax.jit
def resnet_top_forward(x_nchw, params):
    # TODO(synk): BatchNorm is eval-mode only (running stats folded into scale/shift);
    # training-mode batch statistics are not reproduced here.
    N, Cin, H, W = x_nchw.shape
    assert Cin == 3
    # Keeps the in-kernel reshapes layout-free (sublane multiple of 8) and the pool
    # index math simple; holds for the 16x16 test and for 224/256 ImageNet/MPII crops.
    assert H % 4 == 0 and W % 16 == 0, "need H % 4 == 0 and W % 16 == 0"

    Cout, eps = 64, 1e-5
    OH, OW = H // 2, W // 2            # conv 7x7 / s2 / p3 output
    POH, POW = OH // 2, OW // 2        # maxpool 3x3 / s2 / p1 output
    Hv, Wv = OH + 3, OW + 3            # space-to-depth spatial extent (incl. halo)
    C16 = 16                           # 2*2*3 = 12 packed channels, padded to 16

    w, b = params["w"], params["b"]
    gamma, beta = params["gamma"], params["beta"]
    rmean, rvar = params["rmean"], params["rvar"]

    # ---- input: NCHW -> NHWC -> spatial pad -> space-to-depth (2x2 -> channels) -> bf16 ----
    x = jnp.transpose(x_nchw, (0, 2, 3, 1)).astype(jnp.float32)
    xp = jnp.pad(x, ((0, 0), (3, 2 * Hv - H - 3), (3, 2 * Wv - W - 3), (0, 0)))
    xd = xp.reshape(N, Hv, 2, Wv, 2, Cin)
    xd = jnp.transpose(xd, (0, 1, 3, 2, 4, 5)).reshape(N, Hv, Wv, 4 * Cin)
    xd = jnp.pad(xd, ((0, 0), (0, 0), (0, 0), (0, C16 - 4 * Cin))).astype(jnp.bfloat16)

    # ---- weights: 7x7x3 stride-2 conv == 4x4x12 stride-1 conv on the packed input ----
    wt = jnp.transpose(w, (2, 3, 1, 0))                      # (7, 7, Cin, Cout)
    wt = jnp.pad(wt, ((0, 1), (0, 1), (0, 0), (0, 0)))       # (8, 8, Cin, Cout)
    wt = wt.reshape(4, 2, 4, 2, Cin, Cout)                   # (b, q, a, p, c, co)
    wt = jnp.transpose(wt, (0, 2, 1, 3, 4, 5))               # (b, a, q, p, c, co)
    wt = wt.reshape(4, 4, 4 * Cin, Cout)
    wt = jnp.pad(wt, ((0, 0), (0, 0), (0, C16 - 4 * Cin), (0, 0)))
    w_mat = wt.reshape(16 * C16, Cout).astype(jnp.bfloat16)  # (256, 64), K = 256

    # ---- fold conv bias + eval-mode BatchNorm into per-channel scale/shift (f32) ----
    scale_v = gamma / jnp.sqrt(rvar + eps)
    shift_v = beta + (b - rmean) * scale_v
    scale = scale_v.reshape(1, Cout).astype(jnp.float32)
    shift = shift_v.reshape(1, Cout).astype(jnp.float32)

    pooled = pl.pallas_call(
        stem_fused_kernel,
        out_shape=jax.ShapeDtypeStruct((N, POH, POW, Cout), jnp.float32),
        grid=(N,),
        in_specs=[
            pl.BlockSpec((1, Hv, Wv, C16), lambda n: (n, 0, 0, 0)),
            pl.BlockSpec((16 * C16, Cout), lambda n: (0, 0)),
            pl.BlockSpec((1, Cout), lambda n: (0, 0)),
            pl.BlockSpec((1, Cout), lambda n: (0, 0)),
        ],
        out_specs=pl.BlockSpec((1, POH, POW, Cout), lambda n: (n, 0, 0, 0)),
        scratch_shapes=[pltpu.VMEM((POH, OW + 1, Cout), jnp.float32)],
        compiler_params=pltpu.CompilerParams(
            dimension_semantics=("parallel",),
            vmem_limit_bytes=48 * 1024 * 1024,
        ),
    )(xd, w_mat, scale, shift)

    return jnp.transpose(pooled, (0, 3, 1, 2))               # back to NCHW


# --------------------------- pure-JAX reference ----------------------------- #

def resnet_top_reference(x_nchw, params):
    w, b = params["w"], params["b"]
    gamma, beta = params["gamma"], params["beta"]
    rmean, rvar = params["rmean"], params["rvar"]
    eps = 1e-5
    y = jax.lax.conv_general_dilated(
        x_nchw.astype(jnp.float32), w, window_strides=(2, 2),
        padding=((3, 3), (3, 3)),
        dimension_numbers=("NCHW", "OIHW", "NCHW"),
        precision=jax.lax.Precision.HIGHEST,
    ) + b[None, :, None, None]
    y = (y - rmean[None, :, None, None]) / jnp.sqrt(rvar + eps)[None, :, None, None]
    y = y * gamma[None, :, None, None] + beta[None, :, None, None]
    y = jnp.maximum(y, 0.0)
    y = jax.lax.reduce_window(
        y, -jnp.inf, jax.lax.max,
        window_dimensions=(1, 1, 3, 3), window_strides=(1, 1, 2, 2),
        padding=((0, 0), (0, 0), (1, 1), (1, 1)),
    )
    return y


# --------------------------------- main ------------------------------------- #

if __name__ == "__main__":
    key = jax.random.PRNGKey(0)
    kx, kp = jax.random.split(key)
    x = jax.random.normal(kx, (2, 3, 16, 16), jnp.float32)   # NCHW, like PyTorch
    params = init_params(kp)

    out = jax.block_until_ready(resnet_top_forward(x, params))
    ref = jax.block_until_ready(resnet_top_reference(x, params))

    assert out.shape == (2, 64, 4, 4), out.shape
    max_err = float(jnp.max(jnp.abs(out - ref)))
    assert jnp.allclose(out, ref, atol=5e-2, rtol=5e-2), max_err

    print("KERNEL_OK")
</pallas_src>

<mosaic_0001>
module attributes {stable_mosaic.version = 11 : i64} {
  func.func @stem_fused_kernel(%arg0: i32, %arg1: memref<1x11x11x16xbf16, #tpu.memory_space<vmem>>, %arg2: memref<256x64xbf16, #tpu.memory_space<vmem>>, %arg3: memref<1x64xf32, #tpu.memory_space<vmem>>, %arg4: memref<1x64xf32, #tpu.memory_space<vmem>>, %arg5: memref<1x4x4x64xf32, #tpu.memory_space<vmem>>, %arg6: memref<4x9x64xf32, #tpu.memory_space<vmem>>) attributes {dimension_semantics = [#tpu.dimension_semantics<parallel>], iteration_bounds = array<i64: 2>, scalar_prefetch = 0 : i64, scratch_operands = 1 : i64, tpu.core_type = #tpu.core_type<tc>, window_params = [{transform_indices = @transform_0, window_bounds = array<i64: 1, 11, 11, 16>}, {pipeline_mode = #tpu.pipeline_mode<synchronous>, transform_indices = @transform_1, window_bounds = array<i64: 256, 64>}, {pipeline_mode = #tpu.pipeline_mode<synchronous>, transform_indices = @transform_2, window_bounds = array<i64: 1, 64>}, {pipeline_mode = #tpu.pipeline_mode<synchronous>, transform_indices = @transform_3, window_bounds = array<i64: 1, 64>}, {transform_indices = @transform_4, window_bounds = array<i64: 1, 4, 4, 64>}]} {
    %c0 = arith.constant 0 : index
    %c0_0 = arith.constant 0 : index
    %c0_1 = arith.constant 0 : index
    %c0_2 = arith.constant 0 : index
    %0 = vector.load %arg1[%c0, %c0_0, %c0_1, %c0_2] : memref<1x11x11x16xbf16, #tpu.memory_space<vmem>>, vector<1x8x8x16xbf16>
    %1 = vector.shape_cast %0 : vector<1x8x8x16xbf16> to vector<8x8x16xbf16>
    %c0_3 = arith.constant 0 : index
    %c0_4 = arith.constant 0 : index
    %c1 = arith.constant 1 : index
    %c0_5 = arith.constant 0 : index
    %2 = vector.load %arg1[%c0_3, %c0_4, %c1, %c0_5] : memref<1x11x11x16xbf16, #tpu.memory_space<vmem>>, vector<1x8x8x16xbf16>
    %3 = vector.shape_cast %2 : vector<1x8x8x16xbf16> to vector<8x8x16xbf16>
    %c0_6 = arith.constant 0 : index
    %c0_7 = arith.constant 0 : index
    %c2 = arith.constant 2 : index
    %c0_8 = arith.constant 0 : index
    %4 = vector.load %arg1[%c0_6, %c0_7, %c2, %c0_8] : memref<1x11x11x16xbf16, #tpu.memory_space<vmem>>, vector<1x8x8x16xbf16>
    %5 = vector.shape_cast %4 : vector<1x8x8x16xbf16> to vector<8x8x16xbf16>
    %c0_9 = arith.constant 0 : index
    %c0_10 = arith.constant 0 : index
    %c3 = arith.constant 3 : index
    %c0_11 = arith.constant 0 : index
    %6 = vector.load %arg1[%c0_9, %c0_10, %c3, %c0_11] : memref<1x11x11x16xbf16, #tpu.memory_space<vmem>>, vector<1x8x8x16xbf16>
    %7 = vector.shape_cast %6 : vector<1x8x8x16xbf16> to vector<8x8x16xbf16>
    %c0_12 = arith.constant 0 : index
    %c1_13 = arith.constant 1 : index
    %c0_14 = arith.constant 0 : index
    %c0_15 = arith.constant 0 : index
    %8 = vector.load %arg1[%c0_12, %c1_13, %c0_14, %c0_15] : memref<1x11x11x16xbf16, #tpu.memory_space<vmem>>, vector<1x8x8x16xbf16>
    %9 = vector.shape_cast %8 : vector<1x8x8x16xbf16> to vector<8x8x16xbf16>
    %c0_16 = arith.constant 0 : index
    %c1_17 = arith.constant 1 : index
    %c1_18 = arith.constant 1 : index
    %c0_19 = arith.constant 0 : index
    %10 = vector.load %arg1[%c0_16, %c1_17, %c1_18, %c0_19] : memref<1x11x11x16xbf16, #tpu.memory_space<vmem>>, vector<1x8x8x16xbf16>
    %11 = vector.shape_cast %10 : vector<1x8x8x16xbf16> to vector<8x8x16xbf16>
    %c0_20 = arith.constant 0 : index
    %c1_21 = arith.constant 1 : index
    %c2_22 = arith.constant 2 : index
    %c0_23 = arith.constant 0 : index
    %12 = vector.load %arg1[%c0_20, %c1_21, %c2_22, %c0_23] : memref<1x11x11x16xbf16, #tpu.memory_space<vmem>>, vector<1x8x8x16xbf16>
    %13 = vector.shape_cast %12 : vector<1x8x8x16xbf16> to vector<8x8x16xbf16>
    %c0_24 = arith.constant 0 : index
    %c1_25 = arith.constant 1 : index
    %c3_26 = arith.constant 3 : index
    %c0_27 = arith.constant 0 : index
    %14 = vector.load %arg1[%c0_24, %c1_25, %c3_26, %c0_27] : memref<1x11x11x16xbf16, #tpu.memory_space<vmem>>, vector<1x8x8x16xbf16>
    %15 = vector.shape_cast %14 : vector<1x8x8x16xbf16> to vector<8x8x16xbf16>
    %c0_28 = arith.constant 0 : index
    %c2_29 = arith.constant 2 : index
    %c0_30 = arith.constant 0 : index
    %c0_31 = arith.constant 0 : index
    %16 = vector.load %arg1[%c0_28, %c2_29, %c0_30, %c0_31] : memref<1x11x11x16xbf16, #tpu.memory_space<vmem>>, vector<1x8x8x16xbf16>
    %17 = vector.shape_cast %16 : vector<1x8x8x16xbf16> to vector<8x8x16xbf16>
    %c0_32 = arith.constant 0 : index
    %c2_33 = arith.constant 2 : index
    %c1_34 = arith.constant 1 : index
    %c0_35 = arith.constant 0 : index
    %18 = vector.load %arg1[%c0_32, %c2_33, %c1_34, %c0_35] : memref<1x11x11x16xbf16, #tpu.memory_space<vmem>>, vector<1x8x8x16xbf16>
    %19 = vector.shape_cast %18 : vector<1x8x8x16xbf16> to vector<8x8x16xbf16>
    %c0_36 = arith.constant 0 : index
    %c2_37 = arith.constant 2 : index
    %c2_38 = arith.constant 2 : index
    %c0_39 = arith.constant 0 : index
    %20 = vector.load %arg1[%c0_36, %c2_37, %c2_38, %c0_39] : memref<1x11x11x16xbf16, #tpu.memory_space<vmem>>, vector<1x8x8x16xbf16>
    %21 = vector.shape_cast %20 : vector<1x8x8x16xbf16> to vector<8x8x16xbf16>
    %c0_40 = arith.constant 0 : index
    %c2_41 = arith.constant 2 : index
    %c3_42 = arith.constant 3 : index
    %c0_43 = arith.constant 0 : index
    %22 = vector.load %arg1[%c0_40, %c2_41, %c3_42, %c0_43] : memref<1x11x11x16xbf16, #tpu.memory_space<vmem>>, vector<1x8x8x16xbf16>
    %23 = vector.shape_cast %22 : vector<1x8x8x16xbf16> to vector<8x8x16xbf16>
    %c0_44 = arith.constant 0 : index
    %c3_45 = arith.constant 3 : index
    %c0_46 = arith.constant 0 : index
    %c0_47 = arith.constant 0 : index
    %24 = vector.load %arg1[%c0_44, %c3_45, %c0_46, %c0_47] : memref<1x11x11x16xbf16, #tpu.memory_space<vmem>>, vector<1x8x8x16xbf16>
    %25 = vector.shape_cast %24 : vector<1x8x8x16xbf16> to vector<8x8x16xbf16>
    %c0_48 = arith.constant 0 : index
    %c3_49 = arith.constant 3 : index
    %c1_50 = arith.constant 1 : index
    %c0_51 = arith.constant 0 : index
    %26 = vector.load %arg1[%c0_48, %c3_49, %c1_50, %c0_51] : memref<1x11x11x16xbf16, #tpu.memory_space<vmem>>, vector<1x8x8x16xbf16>
    %27 = vector.shape_cast %26 : vector<1x8x8x16xbf16> to vector<8x8x16xbf16>
    %c0_52 = arith.constant 0 : index
    %c3_53 = arith.constant 3 : index
    %c2_54 = arith.constant 2 : index
    %c0_55 = arith.constant 0 : index
    %28 = vector.load %arg1[%c0_52, %c3_53, %c2_54, %c0_55] : memref<1x11x11x16xbf16, #tpu.memory_space<vmem>>, vector<1x8x8x16xbf16>
    %29 = vector.shape_cast %28 : vector<1x8x8x16xbf16> to vector<8x8x16xbf16>
    %c0_56 = arith.constant 0 : index
    %c3_57 = arith.constant 3 : index
    %c3_58 = arith.constant 3 : index
    %c0_59 = arith.constant 0 : index
    %30 = vector.load %arg1[%c0_56, %c3_57, %c3_58, %c0_59] : memref<1x11x11x16xbf16, #tpu.memory_space<vmem>>, vector<1x8x8x16xbf16>
    %31 = vector.shape_cast %30 : vector<1x8x8x16xbf16> to vector<8x8x16xbf16>
    %32 = tpu.concatenate %1, %3, %5, %7, %9, %11, %13, %15, %17, %19, %21, %23, %25, %27, %29, %31 in 2 : vector<8x8x16xbf16>, vector<8x8x16xbf16>, vector<8x8x16xbf16>, vector<8x8x16xbf16>, vector<8x8x16xbf16>, vector<8x8x16xbf16>, vector<8x8x16xbf16>, vector<8x8x16xbf16>, vector<8x8x16xbf16>, vector<8x8x16xbf16>, vector<8x8x16xbf16>, vector<8x8x16xbf16>, vector<8x8x16xbf16>, vector<8x8x16xbf16>, vector<8x8x16xbf16>, vector<8x8x16xbf16> -> vector<8x8x256xbf16>
    %33 = vector.shape_cast %32 : vector<8x8x256xbf16> to vector<64x256xbf16>
    %c0_60 = arith.constant 0 : index
    %c0_61 = arith.constant 0 : index
    %34 = vector.load %arg2[%c0_60, %c0_61] : memref<256x64xbf16, #tpu.memory_space<vmem>>, vector<256x64xbf16>
    %cst = arith.constant dense<0.000000e+00> : vector<64x64xf32>
    %35 = tpu.matmul %33, %34, %cst {dimension_numbers = #tpu.dot_dimension_numbers<[1], [0], [0], [1], [0, 0, 1, 1], [], []>} : vector<64x256xbf16>, vector<256x64xbf16>, vector<64x64xf32> -> vector<64x64xf32>
    %c0_62 = arith.constant 0 : index
    %c0_63 = arith.constant 0 : index
    %36 = vector.load %arg3[%c0_62, %c0_63] : memref<1x64xf32, #tpu.memory_space<vmem>>, vector<1x64xf32>
    %37 = vector.broadcast %36 : vector<1x64xf32> to vector<64x64xf32>
    %38 = arith.mulf %35, %37 : vector<64x64xf32>
    %c0_64 = arith.constant 0 : index
    %c0_65 = arith.constant 0 : index
    %39 = vector.load %arg4[%c0_64, %c0_65] : memref<1x64xf32, #tpu.memory_space<vmem>>, vector<1x64xf32>
    %40 = vector.broadcast %39 : vector<1x64xf32> to vector<64x64xf32>
    %41 = arith.addf %38, %40 : vector<64x64xf32>
    %cst_66 = arith.constant 0.000000e+00 : f32
    %42 = vector.broadcast %cst_66 : f32 to vector<64x64xf32>
    %43 = arith.maximumf %41, %42 : vector<64x64xf32>
    %44 = vector.shape_cast %43 : vector<64x64xf32> to vector<4x2x8x64xf32>
    %45 = vector.extract_strided_slice %44 {offsets = [0, 0, 0, 0], sizes = [4, 1, 8, 64], strides = [1, 1, 1, 1]} : vector<4x2x8x64xf32> to vector<4x1x8x64xf32>
    %46 = vector.shape_cast %45 : vector<4x1x8x64xf32> to vector<4x8x64xf32>
    %47 = vector.extract_strided_slice %44 {offsets = [0, 1, 0, 0], sizes = [4, 1, 8, 64], strides = [1, 1, 1, 1]} : vector<4x2x8x64xf32> to vector<4x1x8x64xf32>
    %48 = vector.shape_cast %47 : vector<4x1x8x64xf32> to vector<4x8x64xf32>
    %cst_67 = arith.constant 0.000000e+00 : f32
    %49 = vector.broadcast %cst_67 : f32 to vector<1x8x64xf32>
    %50 = vector.extract_strided_slice %48 {offsets = [0, 0, 0], sizes = [3, 8, 64], strides = [1, 1, 1]} : vector<4x8x64xf32> to vector<3x8x64xf32>
    %51 = tpu.concatenate %49, %50 in 0 : vector<1x8x64xf32>, vector<3x8x64xf32> -> vector<4x8x64xf32>
    %52 = arith.maximumf %46, %48 : vector<4x8x64xf32>
    %53 = arith.maximumf %52, %51 : vector<4x8x64xf32>
    %cst_68 = arith.constant 0.000000e+00 : f32
    %54 = vector.broadcast %cst_68 : f32 to vector<4x1x64xf32>
    %c0_69 = arith.constant 0 : index
    %c0_70 = arith.constant 0 : index
    %c0_71 = arith.constant 0 : index
    %55 = vector.load %arg6[%c0_69, %c0_70, %c0_71] : memref<4x9x64xf32, #tpu.memory_space<vmem>>, vector<4x1x64xf32>
    tpu.vector_store %arg6[%c0_69, %c0_70, %c0_71], %54 {strides = array<i32>} : memref<4x9x64xf32, #tpu.memory_space<vmem>>, vector<4x1x64xf32>,
    %c0_72 = arith.constant 0 : index
    %c1_73 = arith.constant 1 : index
    %c0_74 = arith.constant 0 : index
    %56 = vector.load %arg6[%c0_72, %c1_73, %c0_74] : memref<4x9x64xf32, #tpu.memory_space<vmem>>, vector<4x8x64xf32>
    tpu.vector_store %arg6[%c0_72, %c1_73, %c0_74], %53 {strides = array<i32>} : memref<4x9x64xf32, #tpu.memory_space<vmem>>, vector<4x8x64xf32>,
    %c0_75 = arith.constant 0 : index
    %c0_76 = arith.constant 0 : index
    %c0_77 = arith.constant 0 : index
    %57 = tpu.strided_load %arg6[%c0_75, %c0_76, %c0_77] {strides = array<i32: 1, 2, 1>} : memref<4x9x64xf32, #tpu.memory_space<vmem>>, vector<4x4x64xf32>
    %c0_78 = arith.constant 0 : index
    %c1_79 = arith.constant 1 : index
    %c0_80 = arith.constant 0 : index
    %58 = tpu.strided_load %arg6[%c0_78, %c1_79, %c0_80] {strides = array<i32: 1, 2, 1>} : memref<4x9x64xf32, #tpu.memory_space<vmem>>, vector<4x4x64xf32>
    %59 = arith.maximumf %57, %58 : vector<4x4x64xf32>
    %c0_81 = arith.constant 0 : index
    %c2_82 = arith.constant 2 : index
    %c0_83 = arith.constant 0 : index
    %60 = tpu.strided_load %arg6[%c0_81, %c2_82, %c0_83] {strides = array<i32: 1, 2, 1>} : memref<4x9x64xf32, #tpu.memory_space<vmem>>, vector<4x4x64xf32>
    %61 = arith.maximumf %59, %60 : vector<4x4x64xf32>
    %c0_84 = arith.constant 0 : index
    %c0_85 = arith.constant 0 : index
    %c0_86 = arith.constant 0 : index
    %c0_87 = arith.constant 0 : index
    %62 = vector.load %arg5[%c0_84, %c0_85, %c0_86, %c0_87] : memref<1x4x4x64xf32, #tpu.memory_space<vmem>>, vector<1x4x4x64xf32>
    %63 = vector.shape_cast %62 : vector<1x4x4x64xf32> to vector<4x4x64xf32>
    %64 = vector.shape_cast %61 : vector<4x4x64xf32> to vector<1x4x4x64xf32>
    tpu.vector_store %arg5[%c0_84, %c0_85, %c0_86, %c0_87], %64 {strides = array<i32>} : memref<1x4x4x64xf32, #tpu.memory_space<vmem>>, vector<1x4x4x64xf32>,
    return
  }
  func.func @transform_0(%arg0: i32) -> (i32, i32, i32, i32) {
    %c0_i32 = arith.constant 0 : i32
    %c0_i32_0 = arith.constant 0 : i32
    %c0_i32_1 = arith.constant 0 : i32
    %c0_i32_2 = arith.constant 0 : i32
    return %arg0, %c0_i32, %c0_i32_0, %c0_i32_1 : i32, i32, i32, i32
  }
  func.func @transform_1(%arg0: i32) -> (i32, i32) {
    %c0_i32 = arith.constant 0 : i32
    %c0_i32_0 = arith.constant 0 : i32
    %c0_i32_1 = arith.constant 0 : i32
    return %c0_i32, %c0_i32_0 : i32, i32
  }
  func.func @transform_2(%arg0: i32) -> (i32, i32) {
    %c0_i32 = arith.constant 0 : i32
    %c0_i32_0 = arith.constant 0 : i32
    %c0_i32_1 = arith.constant 0 : i32
    return %c0_i32, %c0_i32_0 : i32, i32
  }
  func.func @transform_3(%arg0: i32) -> (i32, i32) {
    %c0_i32 = arith.constant 0 : i32
    %c0_i32_0 = arith.constant 0 : i32
    %c0_i32_1 = arith.constant 0 : i32
    return %c0_i32, %c0_i32_0 : i32, i32
  }
  func.func @transform_4(%arg0: i32) -> (i32, i32, i32, i32) {
    %c0_i32 = arith.constant 0 : i32
    %c0_i32_0 = arith.constant 0 : i32
    %c0_i32_1 = arith.constant 0 : i32
    %c0_i32_2 = arith.constant 0 : i32
    return %arg0, %c0_i32, %c0_i32_0, %c0_i32_1 : i32, i32, i32, i32
  }
}

</mosaic_0001>

<llo_original>
// kernel: resnet_top_forward.1
$region0: #{resnet_top_forward.1}
  #allocation0 [shape = 'u32[]', space=smem, size = 0x4, offset = 0x4, fixed_abs, tag = 'smem constant byte address 0x4 - core index']
  #allocation1 [shape = 'u32[144,128]{1,0:T(1,128)}', space=vmem, size = 0x12000, scoped, tag = 'internal scratch']
  #allocation2 [shape = 'f32[4,9,64]{2,1,0:T(8,128)}', space=vmem, size = 0x8000, scoped, tag = 'scratch operand']
  %s0 = inlined_call_operand.vmem [shape: bf16[2,11,11,16], index: 0, kind: input, shape index: {}]
  %s1 = inlined_call_operand.vmem [shape: bf16[256,64], index: 1, kind: input, shape index: {}]
  %s2 = inlined_call_operand.vmem [shape: f32[1,64], index: 2, kind: input, shape index: {}]
  %s3 = inlined_call_operand.vmem [shape: f32[1,64], index: 3, kind: input, shape index: {}]
  %s4 = inlined_call_operand.hbm [shape: f32[2,4,4,64], index: 4, kind: output, shape index: {}]
  %s5 = sld [smem:[#allocation0]]
  $region49: #{resnet_top_forward.1} parent=0
    _
  %s7 = ssub.s32 1, %s5
  %s8 = scalar_select 0, %s7, %s5
  $region1: #{resnet_top_forward.1} parent=0
    #allocation3 [shape = 'u8[16384]{0}', space=vmem, size = 0x4000, scoped, tag = 'output window, operand 0']
    #allocation4 [shape = 's32[2]{0}', space=sflag, size = 0x8, scoped, tag = 'scoped memory for resnet_top_forward.1']
    %9 = vsyncpa [#allocation4], 0
    %s10 = scalar_lea.sflag [#allocation4], 1
    %11 = vsyncpa %s10, 0
    loop: start=0, step=1, limit=4
    $region2: #{resnet_top_forward.1} parent=1 // loop_pre_header
      _
    $region3: #{resnet_top_forward.1} parent=1 // loop_header
      %s13 = sphi 0, %s17
      %p14 = scmp.ge.s32.totalorder %s13, 4
      %s23 = sphi 0, %s25
      %s26 = sphi 0, %s23
      %s27 = sphi 0, %s26
      %s43 = sphi 0, %s27
      %s47 = sphi 0, %s47
      %s49 = sphi 0, %s47
      %s50 = sphi 0, %s49
      %s64 = sphi 0, %s50
      %s68 = sphi 0, %s68
      %s70 = sphi 0, %s68
      %s71 = sphi 0, %s70
      %s85 = sphi 0, %s71
      %s89 = sphi 0, %s89
      %s91 = sphi 0, %s89
      %s92 = sphi 0, %s91
      %s106 = sphi 0, %s92
      %s112 = sphi 0, %s114
      %s115 = sphi 0, %s112
      %s116 = sphi 0, %s115
      %s132 = sphi 0, %s116
    $region4: #{resnet_top_forward.1} parent=1 // loop_header_branch
      %16 = sbr.rel (%p14) target = $region8
    $region5: #{resnet_top_forward.1} parent=1 // loop_body
      %s18 = ssub.s32 %s13, 1
      %s19 = ssub.s32 %s13, 2
      %s20 = sadd.s32 %s13, 1
      %s21 = ssub.s32 %s13, %s20
      %p22 = scmp.eq.s32.totalorder %s21, 0
      %s24 = sadd.s32 %s23, 1
      %s25 = scalar_select %p22, %s23, %s24
      %p28 = pneg %p22
      %p29 = scmp.eq.s32.totalorder %s13, 1
      %p30 = por %p28, %p29
      %p31 = scmp.ne.s32.totalorder %s23, %s26
      %p32 = scmp.eq.s32.totalorder %s13, 0
      %p33 = por %p31, %p32
      %p34 = scmp.ne.s32.totalorder %s23, %s26
      %p35 = scmp.eq.s32.totalorder %s18, 1
      %p36 = por %p34, %p35
      %p37 = scmp.ne.s32.totalorder %s26, %s27
      %p38 = scmp.eq.s32.totalorder %s18, 0
      %p39 = por %p37, %p38
      %p40 = scmp.ne.s32.totalorder %s26, %s27
      %p41 = scmp.eq.s32.totalorder %s19, 1
      %p42 = por %p40, %p41
      %p44 = scmp.ne.s32.totalorder %s27, %s43
      %p45 = scmp.eq.s32.totalorder %s19, 0
      %p46 = por %p44, %p45
      %s48 = sadd.s32 %s47, 1
      %p51 = scmp.eq.s32.totalorder %s13, 1
      %p52 = scmp.ne.s32.totalorder %s47, %s49
      %p53 = scmp.eq.s32.totalorder %s13, 0
      %p54 = por %p52, %p53
      %p55 = scmp.ne.s32.totalorder %s47, %s49
      %p56 = scmp.eq.s32.totalorder %s18, 1
      %p57 = por %p55, %p56
      %p58 = scmp.ne.s32.totalorder %s49, %s50
      %p59 = scmp.eq.s32.totalorder %s18, 0
      %p60 = por %p58, %p59
      %p61 = scmp.ne.s32.totalorder %s49, %s50
      %p62 = scmp.eq.s32.totalorder %s19, 1
      %p63 = por %p61, %p62
      %p65 = scmp.ne.s32.totalorder %s50, %s64
      %p66 = scmp.eq.s32.totalorder %s19, 0
      %p67 = por %p65, %p66
      %s69 = sadd.s32 %s68, 1
      %p72 = scmp.eq.s32.totalorder %s13, 1
      %p73 = scmp.ne.s32.totalorder %s68, %s70
      %p74 = scmp.eq.s32.totalorder %s13, 0
      %p75 = por %p73, %p74
      %p76 = scmp.ne.s32.totalorder %s68, %s70
      %p77 = scmp.eq.s32.totalorder %s18, 1
      %p78 = por %p76, %p77
      %p79 = scmp.ne.s32.totalorder %s70, %s71
      %p80 = scmp.eq.s32.totalorder %s18, 0
      %p81 = por %p79, %p80
      %p82 = scmp.ne.s32.totalorder %s70, %s71
      %p83 = scmp.eq.s32.totalorder %s19, 1
      %p84 = por %p82, %p83
      %p86 = scmp.ne.s32.totalorder %s71, %s85
      %p87 = scmp.eq.s32.totalorder %s19, 0
      %p88 = por %p86, %p87
      %s90 = sadd.s32 %s89, 1
      %p93 = scmp.eq.s32.totalorder %s13, 1
      %p94 = scmp.ne.s32.totalorder %s89, %s91
      %p95 = scmp.eq.s32.totalorder %s13, 0
      %p96 = por %p94, %p95
      %p97 = scmp.ne.s32.totalorder %s89, %s91
      %p98 = scmp.eq.s32.totalorder %s18, 1
      %p99 = por %p97, %p98
      %p100 = scmp.ne.s32.totalorder %s91, %s92
      %p101 = scmp.eq.s32.totalorder %s18, 0
      %p102 = por %p100, %p101
      %p103 = scmp.ne.s32.totalorder %s91, %s92
      %p104 = scmp.eq.s32.totalorder %s19, 1
      %p105 = por %p103, %p104
      %p107 = scmp.ne.s32.totalorder %s92, %s106
      %p108 = scmp.eq.s32.totalorder %s19, 0
      %p109 = por %p107, %p108
      %s110 = ssub.s32 %s13, %s20
      %p111 = scmp.eq.s32.totalorder %s110, 0
      %s113 = sadd.s32 %s112, 1
      %s114 = scalar_select %p111, %s112, %s113
      %p117 = pneg %p111
      %p118 = scmp.eq.s32.totalorder %s13, 1
      %p119 = por %p117, %p118
      %p120 = scmp.ne.s32.totalorder %s112, %s115
      %p121 = scmp.eq.s32.totalorder %s13, 0
      %p122 = por %p120, %p121
      %p123 = scmp.ne.s32.totalorder %s112, %s115
      %p124 = scmp.eq.s32.totalorder %s18, 1
      %p125 = por %p123, %p124
      %p126 = scmp.ne.s32.totalorder %s115, %s116
      %p127 = scmp.eq.s32.totalorder %s18, 0
      %p128 = por %p126, %p127
      %p129 = scmp.ne.s32.totalorder %s115, %s116
      %p130 = scmp.eq.s32.totalorder %s19, 1
      %p131 = por %p129, %p130
      %p133 = scmp.ne.s32.totalorder %s116, %s132
      %p134 = scmp.eq.s32.totalorder %s19, 0
      %p135 = por %p133, %p134
      %p136 = scmp.le.s32.totalorder 1, %s13
      %p137 = scmp.lt.s32.totalorder %s13, 3
      %p138 = pnand %p136, %p137
      %p139 = pneg %p138
      // Predicated region
      $region9: #{resnet_top_forward.1} parent=5 // pred_check
        _
      $region10: #{resnet_top_forward.1} parent=5 // pred_check_branch
        %141 = sbr.rel (%p138) target = $region12
      $region11: #{resnet_top_forward.1} parent=5 // pred_region
        %s142 = ssub.s32 %s13, 1
        // Predicated region
        $region13: #{resnet_top_forward.1} parent=11 // pred_check
          %p143 = pneg %p60
        $region14: #{resnet_top_forward.1} parent=11 // pred_check_branch
          %145 = sbr.rel (%p143) target = $region16
        $region15: #{resnet_top_forward.1} parent=11 // pred_region
          _
        $region16: #{resnet_top_forward.1} parent=11 // pred_fallthru
          _
        // Predicated region
        $region17: #{resnet_top_forward.1} parent=11 // pred_check
          %p146 = pneg %p81
        $region18: #{resnet_top_forward.1} parent=11 // pred_check_branch
          %148 = sbr.rel (%p146) target = $region20
        $region19: #{resnet_top_forward.1} parent=11 // pred_region
          _
        $region20: #{resnet_top_forward.1} parent=11 // pred_fallthru
          _
        // Predicated region
        $region21: #{resnet_top_forward.1} parent=11 // pred_check
          %p149 = pneg %p102
        $region22: #{resnet_top_forward.1} parent=11 // pred_check_branch
          %151 = sbr.rel (%p149) target = $region24
        $region23: #{resnet_top_forward.1} parent=11 // pred_region
          _
        $region24: #{resnet_top_forward.1} parent=11 // pred_fallthru
          _
      $region12: #{resnet_top_forward.1} parent=5 // pred_fallthru
        _
      %p152 = scmp.lt.s32.totalorder %s13, 2
      // Predicated region
      $region25: #{resnet_top_forward.1} parent=5 // pred_check
        %p153 = pneg %p152
      $region26: #{resnet_top_forward.1} parent=5 // pred_check_branch
        %155 = sbr.rel (%p153) target = $region28
      $region27: #{resnet_top_forward.1} parent=5 // pred_region
        // Predicated region
        $region29: #{resnet_top_forward.1} parent=27 // pred_check
          %p156 = pneg %p33
        $region30: #{resnet_top_forward.1} parent=27 // pred_check_branch
          %158 = sbr.rel (%p156) target = $region32
        $region31: #{resnet_top_forward.1} parent=27 // pred_region
          %p159 = scmp.lt.s32.totalorder %s13, 1
          %s160 = scalar_select %p159, %s13, 1
          %s161 = smul.addr %s160, 22
          %s162 = smul.addr %s161, 4
          %s163 = scalar_lea.vmem %s0, %s162
        $region32: #{resnet_top_forward.1} parent=27 // pred_fallthru
          _
      $region28: #{resnet_top_forward.1} parent=5 // pred_fallthru
        _
      %p164 = scmp.le.s32.totalorder 1, %s13
      %p165 = scmp.lt.s32.totalorder %s13, 3
      %p166 = pnand %p164, %p165
      %p167 = pneg %p166
      // Predicated region
      $region33: #{resnet_top_forward.1} parent=5 // pred_check
        _
      $region34: #{resnet_top_forward.1} parent=5 // pred_check_branch
        %169 = sbr.rel (%p166) target = $region36
      $region35: #{resnet_top_forward.1} parent=5 // pred_region
        %s170 = ssub.s32 %s13, 1
        %p171 = scmp.lt.s32.totalorder %s18, 1
        %s172 = scalar_select %p171, %s18, 1
        %s173 = smul.addr %s172, 22
        %s174 = smul.addr %s173, 4
        %s175 = scalar_lea.vmem %s0, %s174
        %p176 = pneg %p39
        %p177 = pneg %p36
        %p178 = pneg %p60
        %p179 = pneg %p57
        %p180 = pneg %p81
        %p181 = pneg %p78
        %p182 = pneg %p102
        %p183 = pneg %p99
        %p184 = pneg %p128
        %p185 = pneg %p125
        %s186 = sand.u32 %s115, 1
        %s187 = scalar_lea.sflag [#allocation4], %s186
        %s188 = sand.u32 %s115, 1
        %s189 = smul.addr %s188, 16
        %s190 = scalar_lea.vmem [#allocation3], %s189
        %p191 = scmp.lt.s32.totalorder %s18, 1
        %s192 = scalar_select %p191, %s18, 1
        %s193 = smul.addr %s192, 22
        %s194 = smul.addr %s193, 4
        %s195 = scalar_lea.vmem %s0, %s194
        %v197 = vld [vmem:[%s195] sm:$0xf]
        %v198 = vld [vmem:[%s195 + $0x8] sm:$0xf]
        %v199 = vld [vmem:[%s195 + $0x10] sm:$0xf]
        %v200 = vld [vmem:[%s195 + $0x18] sm:$0xf]
        %v201 = vld [vmem:[%s195 + $0x20] sm:$0xf]
        %v202 = vld [vmem:[%s195 + $0x28] sm:$0xf]
        %v203 = vld [vmem:[%s195 + $0x30] sm:$0xf]
        %v204 = vld [vmem:[%s195 + $0x38] sm:$0xf]
        %v205 = vld [vmem:[%s195 + $0x4] sm:$0x1]
        %v206 = vld [vmem:[%s195 + $0xc] sm:$0x1]
        %v207 = vld [vmem:[%s195 + $0x14] sm:$0x1]
        %v208 = vld [vmem:[%s195 + $0x1c] sm:$0x1]
        %v209 = vld [vmem:[%s195 + $0x24] sm:$0x1]
        %v210 = vld [vmem:[%s195 + $0x2c] sm:$0x1]
        %v211 = vld [vmem:[%s195 + $0x34] sm:$0x1]
        %v212 = vld [vmem:[%s195 + $0x3c] sm:$0x1]
        %v213 = vld [vmem:[%s195] sm:$0xe]
        %v214 = vld [vmem:[%s195 + $0x8] sm:$0xe]
        %v215 = vld [vmem:[%s195 + $0x10] sm:$0xe]
        %v216 = vld [vmem:[%s195 + $0x18] sm:$0xe]
        %v217 = vld [vmem:[%s195 + $0x20] sm:$0xe]
        %v218 = vld [vmem:[%s195 + $0x28] sm:$0xe]
        %v219 = vld [vmem:[%s195 + $0x30] sm:$0xe]
        %v220 = vld [vmem:[%s195 + $0x38] sm:$0xe]
        %v221 = vld [vmem:[%s195 + $0x4] sm:$0x3]
        %v222 = vld [vmem:[%s195 + $0xc] sm:$0x3]
        %v223 = vld [vmem:[%s195 + $0x14] sm:$0x3]
        %v224 = vld [vmem:[%s195 + $0x1c] sm:$0x3]
        %v225 = vld [vmem:[%s195 + $0x24] sm:$0x3]
        %v226 = vld [vmem:[%s195 + $0x2c] sm:$0x3]
        %v227 = vld [vmem:[%s195 + $0x34] sm:$0x3]
        %v228 = vld [vmem:[%s195 + $0x3c] sm:$0x3]
        %s229 = scalar_lea.vmem %s195, 8
        %v230 = vld [vmem:[%s229] sm:$0xf]
        %v231 = vld [vmem:[%s229 + $0x8] sm:$0xf]
        %v232 = vld [vmem:[%s229 + $0x10] sm:$0xf]
        %v233 = vld [vmem:[%s229 + $0x18] sm:$0xf]
        %v234 = vld [vmem:[%s229 + $0x20] sm:$0xf]
        %v235 = vld [vmem:[%s229 + $0x28] sm:$0xf]
        %v236 = vld [vmem:[%s229 + $0x30] sm:$0xf]
        %v237 = vld [vmem:[%s229 + $0x38] sm:$0xf]
        %v238 = vld [vmem:[%s229 + $0x4] sm:$0x1]
        %v239 = vld [vmem:[%s229 + $0xc] sm:$0x1]
        %v240 = vld [vmem:[%s229 + $0x14] sm:$0x1]
        %v241 = vld [vmem:[%s229 + $0x1c] sm:$0x1]
        %v242 = vld [vmem:[%s229 + $0x24] sm:$0x1]
        %v243 = vld [vmem:[%s229 + $0x2c] sm:$0x1]
        %v244 = vld [vmem:[%s229 + $0x34] sm:$0x1]
        %v245 = vld [vmem:[%s229 + $0x3c] sm:$0x1]
        %v246 = vld [vmem:[%s229] sm:$0xe]
        %v247 = vld [vmem:[%s229 + $0x8] sm:$0xe]
        %v248 = vld [vmem:[%s229 + $0x10] sm:$0xe]
        %v249 = vld [vmem:[%s229 + $0x18] sm:$0xe]
        %v250 = vld [vmem:[%s229 + $0x20] sm:$0xe]
        %v251 = vld [vmem:[%s229 + $0x28] sm:$0xe]
        %v252 = vld [vmem:[%s229 + $0x30] sm:$0xe]
        %v253 = vld [vmem:[%s229 + $0x38] sm:$0xe]
        %v254 = vld [vmem:[%s229 + $0x4] sm:$0x3]
        %v255 = vld [vmem:[%s229 + $0xc] sm:$0x3]
        %v256 = vld [vmem:[%s229 + $0x14] sm:$0x3]
        %v257 = vld [vmem:[%s229 + $0x1c] sm:$0x3]
        %v258 = vld [vmem:[%s229 + $0x24] sm:$0x3]
        %v259 = vld [vmem:[%s229 + $0x2c] sm:$0x3]
        %v260 = vld [vmem:[%s229 + $0x34] sm:$0x3]
        %v261 = vld [vmem:[%s229 + $0x3c] sm:$0x3]
        %s262 = scalar_lea.vmem %s195, 16
        %v263 = vld [vmem:[%s262] sm:$0xf]
        %v264 = vld [vmem:[%s262 + $0x8] sm:$0xf]
        %v265 = vld [vmem:[%s262 + $0x10] sm:$0xf]
        %v266 = vld [vmem:[%s262 + $0x18] sm:$0xf]
        %v267 = vld [vmem:[%s262 + $0x20] sm:$0xf]
        %v268 = vld [vmem:[%s262 + $0x28] sm:$0xf]
        %v269 = vld [vmem:[%s262 + $0x30] sm:$0xf]
        %v270 = vld [vmem:[%s262 + $0x38] sm:$0xf]
        %v271 = vld [vmem:[%s262 + $0x4] sm:$0x1]
        %v272 = vld [vmem:[%s262 + $0xc] sm:$0x1]
        %v273 = vld [vmem:[%s262 + $0x14] sm:$0x1]
        %v274 = vld [vmem:[%s262 + $0x1c] sm:$0x1]
        %v275 = vld [vmem:[%s262 + $0x24] sm:$0x1]
        %v276 = vld [vmem:[%s262 + $0x2c] sm:$0x1]
        %v277 = vld [vmem:[%s262 + $0x34] sm:$0x1]
        %v278 = vld [vmem:[%s262 + $0x3c] sm:$0x1]
        %v279 = vld [vmem:[%s262] sm:$0xe]
        %v280 = vld [vmem:[%s262 + $0x8] sm:$0xe]
        %v281 = vld [vmem:[%s262 + $0x10] sm:$0xe]
        %v282 = vld [vmem:[%s262 + $0x18] sm:$0xe]
        %v283 = vld [vmem:[%s262 + $0x20] sm:$0xe]
        %v284 = vld [vmem:[%s262 + $0x28] sm:$0xe]
        %v285 = vld [vmem:[%s262 + $0x30] sm:$0xe]
        %v286 = vld [vmem:[%s262 + $0x38] sm:$0xe]
        %v287 = vld [vmem:[%s262 + $0x4] sm:$0x3]
        %v288 = vld [vmem:[%s262 + $0xc] sm:$0x3]
        %v289 = vld [vmem:[%s262 + $0x14] sm:$0x3]
        %v290 = vld [vmem:[%s262 + $0x1c] sm:$0x3]
        %v291 = vld [vmem:[%s262 + $0x24] sm:$0x3]
        %v292 = vld [vmem:[%s262 + $0x2c] sm:$0x3]
        %v293 = vld [vmem:[%s262 + $0x34] sm:$0x3]
        %v294 = vld [vmem:[%s262 + $0x3c] sm:$0x3]
        %s295 = scalar_lea.vmem %s195, 24
        %v296 = vld [vmem:[%s295] sm:$0xf]
        %v297 = vld [vmem:[%s295 + $0x8] sm:$0xf]
        %v298 = vld [vmem:[%s295 + $0x10] sm:$0xf]
        %v299 = vld [vmem:[%s295 + $0x18] sm:$0xf]
        %v300 = vld [vmem:[%s295 + $0x20] sm:$0xf]
        %v301 = vld [vmem:[%s295 + $0x28] sm:$0xf]
        %v302 = vld [vmem:[%s295 + $0x30] sm:$0xf]
        %v303 = vld [vmem:[%s295 + $0x38] sm:$0xf]
        %v304 = vld [vmem:[%s295 + $0x4] sm:$0x1]
        %v305 = vld [vmem:[%s295 + $0xc] sm:$0x1]
        %v306 = vld [vmem:[%s295 + $0x14] sm:$0x1]
        %v307 = vld [vmem:[%s295 + $0x1c] sm:$0x1]
        %v308 = vld [vmem:[%s295 + $0x24] sm:$0x1]
        %v309 = vld [vmem:[%s295 + $0x2c] sm:$0x1]
        %v310 = vld [vmem:[%s295 + $0x34] sm:$0x1]
        %v311 = vld [vmem:[%s295 + $0x3c] sm:$0x1]
        %v312 = vld [vmem:[%s295] sm:$0xe]
        %v313 = vld [vmem:[%s295 + $0x8] sm:$0xe]
        %v314 = vld [vmem:[%s295 + $0x10] sm:$0xe]
        %v315 = vld [vmem:[%s295 + $0x18] sm:$0xe]
        %v316 = vld [vmem:[%s295 + $0x20] sm:$0xe]
        %v317 = vld [vmem:[%s295 + $0x28] sm:$0xe]
        %v318 = vld [vmem:[%s295 + $0x30] sm:$0xe]
        %v319 = vld [vmem:[%s295 + $0x38] sm:$0xe]
        %v320 = vld [vmem:[%s295 + $0x4] sm:$0x3]
        %v321 = vld [vmem:[%s295 + $0xc] sm:$0x3]
        %v322 = vld [vmem:[%s295 + $0x14] sm:$0x3]
        %v323 = vld [vmem:[%s295 + $0x1c] sm:$0x3]
        %v324 = vld [vmem:[%s295 + $0x24] sm:$0x3]
        %v325 = vld [vmem:[%s295 + $0x2c] sm:$0x3]
        %v326 = vld [vmem:[%s295 + $0x34] sm:$0x3]
        %v327 = vld [vmem:[%s295 + $0x3c] sm:$0x3]
        %v344 = vunpack.c.l.b16 %v197
        %v345 = vunpack.c.l.b16 %v205
        %v346 = vunpack.c.l.b16 %v198
        %v347 = vunpack.c.l.b16 %v206
        %v348 = vunpack.c.l.b16 %v199
        %v349 = vunpack.c.l.b16 %v207
        %v350 = vunpack.c.l.b16 %v200
        %v351 = vunpack.c.l.b16 %v208
        %v352 = vunpack.c.l.b16 %v201
        %v353 = vunpack.c.l.b16 %v209
        %v354 = vunpack.c.l.b16 %v202
        %v355 = vunpack.c.l.b16 %v210
        %v356 = vunpack.c.l.b16 %v203
        %v357 = vunpack.c.l.b16 %v211
        %v358 = vunpack.c.l.b16 %v204
        %v359 = vunpack.c.l.b16 %v212
        %v360 = vpack.c.b16 %v345, %v344
        %v361 = vpack.c.b16 %v347, %v346
        %v362 = vpack.c.b16 %v349, %v348
        %v363 = vpack.c.b16 %v351, %v350
        %v364 = vpack.c.b16 %v353, %v352
        %v365 = vpack.c.b16 %v355, %v354
        %v366 = vpack.c.b16 %v357, %v356
        %v367 = vpack.c.b16 %v359, %v358
        %v369 = vshrl.u32 %v360, 16
        %v371 = vshll.u32 %v360, 16
        %v373 = vrot.slane %v371, 1
        %v374 = vor.u32 %v369, %v373
        %v376 = vshrl.u32 %v361, 16
        %v378 = vshll.u32 %v361, 16
        %v380 = vrot.slane %v378, 1
        %v381 = vor.u32 %v376, %v380
        %v383 = vshrl.u32 %v362, 16
        %v385 = vshll.u32 %v362, 16
        %v387 = vrot.slane %v385, 1
        %v388 = vor.u32 %v383, %v387
        %v390 = vshrl.u32 %v363, 16
        %v392 = vshll.u32 %v363, 16
        %v394 = vrot.slane %v392, 1
        %v395 = vor.u32 %v390, %v394
        %v397 = vshrl.u32 %v364, 16
        %v399 = vshll.u32 %v364, 16
        %v401 = vrot.slane %v399, 1
        %v402 = vor.u32 %v397, %v401
        %v404 = vshrl.u32 %v365, 16
        %v406 = vshll.u32 %v365, 16
        %v408 = vrot.slane %v406, 1
        %v409 = vor.u32 %v404, %v408
        %v411 = vshrl.u32 %v366, 16
        %v413 = vshll.u32 %v366, 16
        %v415 = vrot.slane %v413, 1
        %v416 = vor.u32 %v411, %v415
        %v418 = vshrl.u32 %v367, 16
        %v420 = vshll.u32 %v367, 16
        %v422 = vrot.slane %v420, 1
        %v423 = vor.u32 %v418, %v422
        %424 = vrot.lane.b32.xlu0 %v374, 16
        %v425 = vpop.permute.xlu0 %424
        %426 = vrot.lane.b32.xlu0 %v381, 16
        %v427 = vpop.permute.xlu0 %426
        %428 = vrot.lane.b32.xlu0 %v388, 16
        %v429 = vpop.permute.xlu0 %428
        %430 = vrot.lane.b32.xlu0 %v395, 16
        %v431 = vpop.permute.xlu0 %430
        %432 = vrot.lane.b32.xlu0 %v402, 16
        %v433 = vpop.permute.xlu0 %432
        %434 = vrot.lane.b32.xlu0 %v409, 16
        %v435 = vpop.permute.xlu0 %434
        %436 = vrot.lane.b32.xlu0 %v416, 16
        %v437 = vpop.permute.xlu0 %436
        %438 = vrot.lane.b32.xlu0 %v423, 16
        %v439 = vpop.permute.xlu0 %438
        %v448 = vunpack.c.l.b16 %v213
        %v449 = vunpack.c.l.b16 %v214
        %v450 = vunpack.c.l.b16 %v215
        %v451 = vunpack.c.l.b16 %v216
        %v452 = vunpack.c.l.b16 %v217
        %v453 = vunpack.c.l.b16 %v218
        %v454 = vunpack.c.l.b16 %v219
        %v455 = vunpack.c.l.b16 %v220
        %v456 = vpack.c.b16 %v345, %v448
        %v457 = vpack.c.b16 %v347, %v449
        %v458 = vpack.c.b16 %v349, %v450
        %v459 = vpack.c.b16 %v351, %v451
        %v460 = vpack.c.b16 %v353, %v452
        %v461 = vpack.c.b16 %v355, %v453
        %v462 = vpack.c.b16 %v357, %v454
        %v463 = vpack.c.b16 %v359, %v455
        %v464 = vrot.slane %v456, 1
        %v465 = vrot.slane %v457, 1
        %v466 = vrot.slane %v458, 1
        %v467 = vrot.slane %v459, 1
        %v468 = vrot.slane %v460, 1
        %v469 = vrot.slane %v461, 1
        %v470 = vrot.slane %v462, 1
        %v471 = vrot.slane %v463, 1
        %472 = vrot.lane.b32.xlu0 %v464, 32
        %v473 = vpop.permute.xlu0 %472
        %474 = vrot.lane.b32.xlu0 %v465, 32
        %v475 = vpop.permute.xlu0 %474
        %476 = vrot.lane.b32.xlu0 %v466, 32
        %v477 = vpop.permute.xlu0 %476
        %478 = vrot.lane.b32.xlu0 %v467, 32
        %v479 = vpop.permute.xlu0 %478
        %480 = vrot.lane.b32.xlu0 %v468, 32
        %v481 = vpop.permute.xlu0 %480
        %482 = vrot.lane.b32.xlu0 %v469, 32
        %v483 = vpop.permute.xlu0 %482
        %484 = vrot.lane.b32.xlu0 %v470, 32
        %v485 = vpop.permute.xlu0 %484
        %486 = vrot.lane.b32.xlu0 %v471, 32
        %v487 = vpop.permute.xlu0 %486
        %v496 = vunpack.c.l.b16 %v221
        %v497 = vunpack.c.l.b16 %v222
        %v498 = vunpack.c.l.b16 %v223
        %v499 = vunpack.c.l.b16 %v224
        %v500 = vunpack.c.l.b16 %v225
        %v501 = vunpack.c.l.b16 %v226
        %v502 = vunpack.c.l.b16 %v227
        %v503 = vunpack.c.l.b16 %v228
        %v504 = vpack.c.b16 %v496, %v448
        %v505 = vpack.c.b16 %v497, %v449
        %v506 = vpack.c.b16 %v498, %v450
        %v507 = vpack.c.b16 %v499, %v451
        %v508 = vpack.c.b16 %v500, %v452
        %v509 = vpack.c.b16 %v501, %v453
        %v510 = vpack.c.b16 %v502, %v454
        %v511 = vpack.c.b16 %v503, %v455
        %v513 = vshrl.u32 %v504, 16
        %v515 = vrot.slane %v513, 1
        %v516 = vshll.u32 %v504, 16
        %v518 = vrot.slane %v516, 2
        %v519 = vor.u32 %v515, %v518
        %v521 = vshrl.u32 %v505, 16
        %v523 = vrot.slane %v521, 1
        %v524 = vshll.u32 %v505, 16
        %v526 = vrot.slane %v524, 2
        %v527 = vor.u32 %v523, %v526
        %v529 = vshrl.u32 %v506, 16
        %v531 = vrot.slane %v529, 1
        %v532 = vshll.u32 %v506, 16
        %v534 = vrot.slane %v532, 2
        %v535 = vor.u32 %v531, %v534
        %v537 = vshrl.u32 %v507, 16
        %v539 = vrot.slane %v537, 1
        %v540 = vshll.u32 %v507, 16
        %v542 = vrot.slane %v540, 2
        %v543 = vor.u32 %v539, %v542
        %v545 = vshrl.u32 %v508, 16
        %v547 = vrot.slane %v545, 1
        %v548 = vshll.u32 %v508, 16
        %v550 = vrot.slane %v548, 2
        %v551 = vor.u32 %v547, %v550
        %v553 = vshrl.u32 %v509, 16
        %v555 = vrot.slane %v553, 1
        %v556 = vshll.u32 %v509, 16
        %v558 = vrot.slane %v556, 2
        %v559 = vor.u32 %v555, %v558
        %v561 = vshrl.u32 %v510, 16
        %v563 = vrot.slane %v561, 1
        %v564 = vshll.u32 %v510, 16
        %v566 = vrot.slane %v564, 2
        %v567 = vor.u32 %v563, %v566
        %v569 = vshrl.u32 %v511, 16
        %v571 = vrot.slane %v569, 1
        %v572 = vshll.u32 %v511, 16
        %v574 = vrot.slane %v572, 2
        %v575 = vor.u32 %v571, %v574
        %576 = vrot.lane.b32.xlu0 %v519, 48
        %v577 = vpop.permute.xlu0 %576
        %578 = vrot.lane.b32.xlu0 %v527, 48
        %v579 = vpop.permute.xlu0 %578
        %580 = vrot.lane.b32.xlu0 %v535, 48
        %v581 = vpop.permute.xlu0 %580
        %582 = vrot.lane.b32.xlu0 %v543, 48
        %v583 = vpop.permute.xlu0 %582
        %584 = vrot.lane.b32.xlu0 %v551, 48
        %v585 = vpop.permute.xlu0 %584
        %586 = vrot.lane.b32.xlu0 %v559, 48
        %v587 = vpop.permute.xlu0 %586
        %588 = vrot.lane.b32.xlu0 %v567, 48
        %v589 = vpop.permute.xlu0 %588
        %590 = vrot.lane.b32.xlu0 %v575, 48
        %v591 = vpop.permute.xlu0 %590
        %v600 = vunpack.c.l.b16 %v230
        %v601 = vunpack.c.l.b16 %v231
        %v602 = vunpack.c.l.b16 %v232
        %v603 = vunpack.c.l.b16 %v233
        %v604 = vunpack.c.l.b16 %v234
        %v605 = vunpack.c.l.b16 %v235
        %v606 = vunpack.c.l.b16 %v236
        %v607 = vunpack.c.l.b16 %v237
        %v608 = vpack.c.b16 %v600, %v600
        %v609 = vpack.c.b16 %v601, %v601
        %v610 = vpack.c.b16 %v602, %v602
        %v611 = vpack.c.b16 %v603, %v603
        %v612 = vpack.c.b16 %v604, %v604
        %v613 = vpack.c.b16 %v605, %v605
        %v614 = vpack.c.b16 %v606, %v606
        %v615 = vpack.c.b16 %v607, %v607
        %616 = vrot.lane.b32.xlu0 %v608, 64
        %v617 = vpop.permute.xlu0 %616
        %618 = vrot.lane.b32.xlu0 %v609, 64
        %v619 = vpop.permute.xlu0 %618
        %620 = vrot.lane.b32.xlu0 %v610, 64
        %v621 = vpop.permute.xlu0 %620
        %622 = vrot.lane.b32.xlu0 %v611, 64
        %v623 = vpop.permute.xlu0 %622
        %624 = vrot.lane.b32.xlu0 %v612, 64
        %v625 = vpop.permute.xlu0 %624
        %626 = vrot.lane.b32.xlu0 %v613, 64
        %v627 = vpop.permute.xlu0 %626
        %628 = vrot.lane.b32.xlu0 %v614, 64
        %v629 = vpop.permute.xlu0 %628
        %630 = vrot.lane.b32.xlu0 %v615, 64
        %v631 = vpop.permute.xlu0 %630
        %v640 = vunpack.c.l.b16 %v238
        %v641 = vunpack.c.l.b16 %v239
        %v642 = vunpack.c.l.b16 %v240
        %v643 = vunpack.c.l.b16 %v241
        %v644 = vunpack.c.l.b16 %v242
        %v645 = vunpack.c.l.b16 %v243
        %v646 = vunpack.c.l.b16 %v244
        %v647 = vunpack.c.l.b16 %v245
        %v648 = vpack.c.b16 %v640, %v600
        %v649 = vpack.c.b16 %v641, %v601
        %v650 = vpack.c.b16 %v642, %v602
        %v651 = vpack.c.b16 %v643, %v603
        %v652 = vpack.c.b16 %v644, %v604
        %v653 = vpack.c.b16 %v645, %v605
        %v654 = vpack.c.b16 %v646, %v606
        %v655 = vpack.c.b16 %v647, %v607
        %v657 = vshrl.u32 %v648, 16
        %v659 = vshll.u32 %v648, 16
        %v661 = vrot.slane %v659, 1
        %v662 = vor.u32 %v657, %v661
        %v664 = vshrl.u32 %v649, 16
        %v666 = vshll.u32 %v649, 16
        %v668 = vrot.slane %v666, 1
        %v669 = vor.u32 %v664, %v668
        %v671 = vshrl.u32 %v650, 16
        %v673 = vshll.u32 %v650, 16
        %v675 = vrot.slane %v673, 1
        %v676 = vor.u32 %v671, %v675
        %v678 = vshrl.u32 %v651, 16
        %v680 = vshll.u32 %v651, 16
        %v682 = vrot.slane %v680, 1
        %v683 = vor.u32 %v678, %v682
        %v685 = vshrl.u32 %v652, 16
        %v687 = vshll.u32 %v652, 16
        %v689 = vrot.slane %v687, 1
        %v690 = vor.u32 %v685, %v689
        %v692 = vshrl.u32 %v653, 16
        %v694 = vshll.u32 %v653, 16
        %v696 = vrot.slane %v694, 1
        %v697 = vor.u32 %v692, %v696
        %v699 = vshrl.u32 %v654, 16
        %v701 = vshll.u32 %v654, 16
        %v703 = vrot.slane %v701, 1
        %v704 = vor.u32 %v699, %v703
        %v706 = vshrl.u32 %v655, 16
        %v708 = vshll.u32 %v655, 16
        %v710 = vrot.slane %v708, 1
        %v711 = vor.u32 %v706, %v710
        %712 = vrot.lane.b32.xlu0 %v662, 80
        %v713 = vpop.permute.xlu0 %712
        %714 = vrot.lane.b32.xlu0 %v669, 80
        %v715 = vpop.permute.xlu0 %714
        %716 = vrot.lane.b32.xlu0 %v676, 80
        %v717 = vpop.permute.xlu0 %716
        %718 = vrot.lane.b32.xlu0 %v683, 80
        %v719 = vpop.permute.xlu0 %718
        %720 = vrot.lane.b32.xlu0 %v690, 80
        %v721 = vpop.permute.xlu0 %720
        %722 = vrot.lane.b32.xlu0 %v697, 80
        %v723 = vpop.permute.xlu0 %722
        %724 = vrot.lane.b32.xlu0 %v704, 80
        %v725 = vpop.permute.xlu0 %724
        %726 = vrot.lane.b32.xlu0 %v711, 80
        %v727 = vpop.permute.xlu0 %726
        %v736 = vunpack.c.l.b16 %v246
        %v737 = vunpack.c.l.b16 %v247
        %v738 = vunpack.c.l.b16 %v248
        %v739 = vunpack.c.l.b16 %v249
        %v740 = vunpack.c.l.b16 %v250
        %v741 = vunpack.c.l.b16 %v251
        %v742 = vunpack.c.l.b16 %v252
        %v743 = vunpack.c.l.b16 %v253
        %v744 = vpack.c.b16 %v640, %v736
        %v745 = vpack.c.b16 %v641, %v737
        %v746 = vpack.c.b16 %v642, %v738
        %v747 = vpack.c.b16 %v643, %v739
        %v748 = vpack.c.b16 %v644, %v740
        %v749 = vpack.c.b16 %v645, %v741
        %v750 = vpack.c.b16 %v646, %v742
        %v751 = vpack.c.b16 %v647, %v743
        %v752 = vrot.slane %v744, 1
        %v753 = vrot.slane %v745, 1
        %v754 = vrot.slane %v746, 1
        %v755 = vrot.slane %v747, 1
        %v756 = vrot.slane %v748, 1
        %v757 = vrot.slane %v749, 1
        %v758 = vrot.slane %v750, 1
        %v759 = vrot.slane %v751, 1
        %760 = vrot.lane.b32.xlu0 %v752, 96
        %v761 = vpop.permute.xlu0 %760
        %762 = vrot.lane.b32.xlu0 %v753, 96
        %v763 = vpop.permute.xlu0 %762
        %764 = vrot.lane.b32.xlu0 %v754, 96
        %v765 = vpop.permute.xlu0 %764
        %766 = vrot.lane.b32.xlu0 %v755, 96
        %v767 = vpop.permute.xlu0 %766
        %768 = vrot.lane.b32.xlu0 %v756, 96
        %v769 = vpop.permute.xlu0 %768
        %770 = vrot.lane.b32.xlu0 %v757, 96
        %v771 = vpop.permute.xlu0 %770
        %772 = vrot.lane.b32.xlu0 %v758, 96
        %v773 = vpop.permute.xlu0 %772
        %774 = vrot.lane.b32.xlu0 %v759, 96
        %v775 = vpop.permute.xlu0 %774
        %v784 = vunpack.c.l.b16 %v254
        %v785 = vunpack.c.l.b16 %v255
        %v786 = vunpack.c.l.b16 %v256
        %v787 = vunpack.c.l.b16 %v257
        %v788 = vunpack.c.l.b16 %v258
        %v789 = vunpack.c.l.b16 %v259
        %v790 = vunpack.c.l.b16 %v260
        %v791 = vunpack.c.l.b16 %v261
        %v792 = vpack.c.b16 %v784, %v736
        %v793 = vpack.c.b16 %v785, %v737
        %v794 = vpack.c.b16 %v786, %v738
        %v795 = vpack.c.b16 %v787, %v739
        %v796 = vpack.c.b16 %v788, %v740
        %v797 = vpack.c.b16 %v789, %v741
        %v798 = vpack.c.b16 %v790, %v742
        %v799 = vpack.c.b16 %v791, %v743
        %v801 = vshrl.u32 %v792, 16
        %v803 = vrot.slane %v801, 1
        %v804 = vshll.u32 %v792, 16
        %v806 = vrot.slane %v804, 2
        %v807 = vor.u32 %v803, %v806
        %v809 = vshrl.u32 %v793, 16
        %v811 = vrot.slane %v809, 1
        %v812 = vshll.u32 %v793, 16
        %v814 = vrot.slane %v812, 2
        %v815 = vor.u32 %v811, %v814
        %v817 = vshrl.u32 %v794, 16
        %v819 = vrot.slane %v817, 1
        %v820 = vshll.u32 %v794, 16
        %v822 = vrot.slane %v820, 2
        %v823 = vor.u32 %v819, %v822
        %v825 = vshrl.u32 %v795, 16
        %v827 = vrot.slane %v825, 1
        %v828 = vshll.u32 %v795, 16
        %v830 = vrot.slane %v828, 2
        %v831 = vor.u32 %v827, %v830
        %v833 = vshrl.u32 %v796, 16
        %v835 = vrot.slane %v833, 1
        %v836 = vshll.u32 %v796, 16
        %v838 = vrot.slane %v836, 2
        %v839 = vor.u32 %v835, %v838
        %v841 = vshrl.u32 %v797, 16
        %v843 = vrot.slane %v841, 1
        %v844 = vshll.u32 %v797, 16
        %v846 = vrot.slane %v844, 2
        %v847 = vor.u32 %v843, %v846
        %v849 = vshrl.u32 %v798, 16
        %v851 = vrot.slane %v849, 1
        %v852 = vshll.u32 %v798, 16
        %v854 = vrot.slane %v852, 2
        %v855 = vor.u32 %v851, %v854
        %v857 = vshrl.u32 %v799, 16
        %v859 = vrot.slane %v857, 1
        %v860 = vshll.u32 %v799, 16
        %v862 = vrot.slane %v860, 2
        %v863 = vor.u32 %v859, %v862
        %864 = vrot.lane.b32.xlu0 %v807, 112
        %v865 = vpop.permute.xlu0 %864
        %866 = vrot.lane.b32.xlu0 %v815, 112
        %v867 = vpop.permute.xlu0 %866
        %868 = vrot.lane.b32.xlu0 %v823, 112
        %v869 = vpop.permute.xlu0 %868
        %870 = vrot.lane.b32.xlu0 %v831, 112
        %v871 = vpop.permute.xlu0 %870
        %872 = vrot.lane.b32.xlu0 %v839, 112
        %v873 = vpop.permute.xlu0 %872
        %874 = vrot.lane.b32.xlu0 %v847, 112
        %v875 = vpop.permute.xlu0 %874
        %876 = vrot.lane.b32.xlu0 %v855, 112
        %v877 = vpop.permute.xlu0 %876
        %878 = vrot.lane.b32.xlu0 %v863, 112
        %v879 = vpop.permute.xlu0 %878
        %v896 = vunpack.c.l.b16 %v263
        %v897 = vunpack.c.l.b16 %v271
        %v898 = vunpack.c.l.b16 %v264
        %v899 = vunpack.c.l.b16 %v272
        %v900 = vunpack.c.l.b16 %v265
        %v901 = vunpack.c.l.b16 %v273
        %v902 = vunpack.c.l.b16 %v266
        %v903 = vunpack.c.l.b16 %v274
        %v904 = vunpack.c.l.b16 %v267
        %v905 = vunpack.c.l.b16 %v275
        %v906 = vunpack.c.l.b16 %v268
        %v907 = vunpack.c.l.b16 %v276
        %v908 = vunpack.c.l.b16 %v269
        %v909 = vunpack.c.l.b16 %v277
        %v910 = vunpack.c.l.b16 %v270
        %v911 = vunpack.c.l.b16 %v278
        %v912 = vpack.c.b16 %v897, %v896
        %v913 = vpack.c.b16 %v899, %v898
        %v914 = vpack.c.b16 %v901, %v900
        %v915 = vpack.c.b16 %v903, %v902
        %v916 = vpack.c.b16 %v905, %v904
        %v917 = vpack.c.b16 %v907, %v906
        %v918 = vpack.c.b16 %v909, %v908
        %v919 = vpack.c.b16 %v911, %v910
        %v921 = vshrl.u32 %v912, 16
        %v923 = vshll.u32 %v912, 16
        %v925 = vrot.slane %v923, 1
        %v926 = vor.u32 %v921, %v925
        %v928 = vshrl.u32 %v913, 16
        %v930 = vshll.u32 %v913, 16
        %v932 = vrot.slane %v930, 1
        %v933 = vor.u32 %v928, %v932
        %v935 = vshrl.u32 %v914, 16
        %v937 = vshll.u32 %v914, 16
        %v939 = vrot.slane %v937, 1
        %v940 = vor.u32 %v935, %v939
        %v942 = vshrl.u32 %v915, 16
        %v944 = vshll.u32 %v915, 16
        %v946 = vrot.slane %v944, 1
        %v947 = vor.u32 %v942, %v946
        %v949 = vshrl.u32 %v916, 16
        %v951 = vshll.u32 %v916, 16
        %v953 = vrot.slane %v951, 1
        %v954 = vor.u32 %v949, %v953
        %v956 = vshrl.u32 %v917, 16
        %v958 = vshll.u32 %v917, 16
        %v960 = vrot.slane %v958, 1
        %v961 = vor.u32 %v956, %v960
        %v963 = vshrl.u32 %v918, 16
        %v965 = vshll.u32 %v918, 16
        %v967 = vrot.slane %v965, 1
        %v968 = vor.u32 %v963, %v967
        %v970 = vshrl.u32 %v919, 16
        %v972 = vshll.u32 %v919, 16
        %v974 = vrot.slane %v972, 1
        %v975 = vor.u32 %v970, %v974
        %976 = vrot.lane.b32.xlu0 %v926, 16
        %v977 = vpop.permute.xlu0 %976
        %978 = vrot.lane.b32.xlu0 %v933, 16
        %v979 = vpop.permute.xlu0 %978
        %980 = vrot.lane.b32.xlu0 %v940, 16
        %v981 = vpop.permute.xlu0 %980
        %982 = vrot.lane.b32.xlu0 %v947, 16
        %v983 = vpop.permute.xlu0 %982
        %984 = vrot.lane.b32.xlu0 %v954, 16
        %v985 = vpop.permute.xlu0 %984
        %986 = vrot.lane.b32.xlu0 %v961, 16
        %v987 = vpop.permute.xlu0 %986
        %988 = vrot.lane.b32.xlu0 %v968, 16
        %v989 = vpop.permute.xlu0 %988
        %990 = vrot.lane.b32.xlu0 %v975, 16
        %v991 = vpop.permute.xlu0 %990
        %v1000 = vunpack.c.l.b16 %v279
        %v1001 = vunpack.c.l.b16 %v280
        %v1002 = vunpack.c.l.b16 %v281
        %v1003 = vunpack.c.l.b16 %v282
        %v1004 = vunpack.c.l.b16 %v283
        %v1005 = vunpack.c.l.b16 %v284
        %v1006 = vunpack.c.l.b16 %v285
        %v1007 = vunpack.c.l.b16 %v286
        %v1008 = vpack.c.b16 %v897, %v1000
        %v1009 = vpack.c.b16 %v899, %v1001
        %v1010 = vpack.c.b16 %v901, %v1002
        %v1011 = vpack.c.b16 %v903, %v1003
        %v1012 = vpack.c.b16 %v905, %v1004
        %v1013 = vpack.c.b16 %v907, %v1005
        %v1014 = vpack.c.b16 %v909, %v1006
        %v1015 = vpack.c.b16 %v911, %v1007
        %v1016 = vrot.slane %v1008, 1
        %v1017 = vrot.slane %v1009, 1
        %v1018 = vrot.slane %v1010, 1
        %v1019 = vrot.slane %v1011, 1
        %v1020 = vrot.slane %v1012, 1
        %v1021 = vrot.slane %v1013, 1
        %v1022 = vrot.slane %v1014, 1
        %v1023 = vrot.slane %v1015, 1
        %1024 = vrot.lane.b32.xlu0 %v1016, 32
        %v1025 = vpop.permute.xlu0 %1024
        %1026 = vrot.lane.b32.xlu0 %v1017, 32
        %v1027 = vpop.permute.xlu0 %1026
        %1028 = vrot.lane.b32.xlu0 %v1018, 32
        %v1029 = vpop.permute.xlu0 %1028
        %1030 = vrot.lane.b32.xlu0 %v1019, 32
        %v1031 = vpop.permute.xlu0 %1030
        %1032 = vrot.lane.b32.xlu0 %v1020, 32
        %v1033 = vpop.permute.xlu0 %1032
        %1034 = vrot.lane.b32.xlu0 %v1021, 32
        %v1035 = vpop.permute.xlu0 %1034
        %1036 = vrot.lane.b32.xlu0 %v1022, 32
        %v1037 = vpop.permute.xlu0 %1036
        %1038 = vrot.lane.b32.xlu0 %v1023, 32
        %v1039 = vpop.permute.xlu0 %1038
        %v1048 = vunpack.c.l.b16 %v287
        %v1049 = vunpack.c.l.b16 %v288
        %v1050 = vunpack.c.l.b16 %v289
        %v1051 = vunpack.c.l.b16 %v290
        %v1052 = vunpack.c.l.b16 %v291
        %v1053 = vunpack.c.l.b16 %v292
        %v1054 = vunpack.c.l.b16 %v293
        %v1055 = vunpack.c.l.b16 %v294
        %v1056 = vpack.c.b16 %v1048, %v1000
        %v1057 = vpack.c.b16 %v1049, %v1001
        %v1058 = vpack.c.b16 %v1050, %v1002
        %v1059 = vpack.c.b16 %v1051, %v1003
        %v1060 = vpack.c.b16 %v1052, %v1004
        %v1061 = vpack.c.b16 %v1053, %v1005
        %v1062 = vpack.c.b16 %v1054, %v1006
        %v1063 = vpack.c.b16 %v1055, %v1007
        %v1065 = vshrl.u32 %v1056, 16
        %v1067 = vrot.slane %v1065, 1
        %v1068 = vshll.u32 %v1056, 16
        %v1070 = vrot.slane %v1068, 2
        %v1071 = vor.u32 %v1067, %v1070
        %v1073 = vshrl.u32 %v1057, 16
        %v1075 = vrot.slane %v1073, 1
        %v1076 = vshll.u32 %v1057, 16
        %v1078 = vrot.slane %v1076, 2
        %v1079 = vor.u32 %v1075, %v1078
        %v1081 = vshrl.u32 %v1058, 16
        %v1083 = vrot.slane %v1081, 1
        %v1084 = vshll.u32 %v1058, 16
        %v1086 = vrot.slane %v1084, 2
        %v1087 = vor.u32 %v1083, %v1086
        %v1089 = vshrl.u32 %v1059, 16
        %v1091 = vrot.slane %v1089, 1
        %v1092 = vshll.u32 %v1059, 16
        %v1094 = vrot.slane %v1092, 2
        %v1095 = vor.u32 %v1091, %v1094
        %v1097 = vshrl.u32 %v1060, 16
        %v1099 = vrot.slane %v1097, 1
        %v1100 = vshll.u32 %v1060, 16
        %v1102 = vrot.slane %v1100, 2
        %v1103 = vor.u32 %v1099, %v1102
        %v1105 = vshrl.u32 %v1061, 16
        %v1107 = vrot.slane %v1105, 1
        %v1108 = vshll.u32 %v1061, 16
        %v1110 = vrot.slane %v1108, 2
        %v1111 = vor.u32 %v1107, %v1110
        %v1113 = vshrl.u32 %v1062, 16
        %v1115 = vrot.slane %v1113, 1
        %v1116 = vshll.u32 %v1062, 16
        %v1118 = vrot.slane %v1116, 2
        %v1119 = vor.u32 %v1115, %v1118
        %v1121 = vshrl.u32 %v1063, 16
        %v1123 = vrot.slane %v1121, 1
        %v1124 = vshll.u32 %v1063, 16
        %v1126 = vrot.slane %v1124, 2
        %v1127 = vor.u32 %v1123, %v1126
        %1128 = vrot.lane.b32.xlu0 %v1071, 48
        %v1129 = vpop.permute.xlu0 %1128
        %1130 = vrot.lane.b32.xlu0 %v1079, 48
        %v1131 = vpop.permute.xlu0 %1130
        %1132 = vrot.lane.b32.xlu0 %v1087, 48
        %v1133 = vpop.permute.xlu0 %1132
        %1134 = vrot.lane.b32.xlu0 %v1095, 48
        %v1135 = vpop.permute.xlu0 %1134
        %1136 = vrot.lane.b32.xlu0 %v1103, 48
        %v1137 = vpop.permute.xlu0 %1136
        %1138 = vrot.lane.b32.xlu0 %v1111, 48
        %v1139 = vpop.permute.xlu0 %1138
        %1140 = vrot.lane.b32.xlu0 %v1119, 48
        %v1141 = vpop.permute.xlu0 %1140
        %1142 = vrot.lane.b32.xlu0 %v1127, 48
        %v1143 = vpop.permute.xlu0 %1142
        %v1152 = vunpack.c.l.b16 %v296
        %v1153 = vunpack.c.l.b16 %v297
        %v1154 = vunpack.c.l.b16 %v298
        %v1155 = vunpack.c.l.b16 %v299
        %v1156 = vunpack.c.l.b16 %v300
        %v1157 = vunpack.c.l.b16 %v301
        %v1158 = vunpack.c.l.b16 %v302
        %v1159 = vunpack.c.l.b16 %v303
        %v1160 = vpack.c.b16 %v1152, %v1152
        %v1161 = vpack.c.b16 %v1153, %v1153
        %v1162 = vpack.c.b16 %v1154, %v1154
        %v1163 = vpack.c.b16 %v1155, %v1155
        %v1164 = vpack.c.b16 %v1156, %v1156
        %v1165 = vpack.c.b16 %v1157, %v1157
        %v1166 = vpack.c.b16 %v1158, %v1158
        %v1167 = vpack.c.b16 %v1159, %v1159
        %1168 = vrot.lane.b32.xlu0 %v1160, 64
        %v1169 = vpop.permute.xlu0 %1168
        %1170 = vrot.lane.b32.xlu0 %v1161, 64
        %v1171 = vpop.permute.xlu0 %1170
        %1172 = vrot.lane.b32.xlu0 %v1162, 64
        %v1173 = vpop.permute.xlu0 %1172
        %1174 = vrot.lane.b32.xlu0 %v1163, 64
        %v1175 = vpop.permute.xlu0 %1174
        %1176 = vrot.lane.b32.xlu0 %v1164, 64
        %v1177 = vpop.permute.xlu0 %1176
        %1178 = vrot.lane.b32.xlu0 %v1165, 64
        %v1179 = vpop.permute.xlu0 %1178
        %1180 = vrot.lane.b32.xlu0 %v1166, 64
        %v1181 = vpop.permute.xlu0 %1180
        %1182 = vrot.lane.b32.xlu0 %v1167, 64
        %v1183 = vpop.permute.xlu0 %1182
        %v1192 = vunpack.c.l.b16 %v304
        %v1193 = vunpack.c.l.b16 %v305
        %v1194 = vunpack.c.l.b16 %v306
        %v1195 = vunpack.c.l.b16 %v307
        %v1196 = vunpack.c.l.b16 %v308
        %v1197 = vunpack.c.l.b16 %v309
        %v1198 = vunpack.c.l.b16 %v310
        %v1199 = vunpack.c.l.b16 %v311
        %v1200 = vpack.c.b16 %v1192, %v1152
        %v1201 = vpack.c.b16 %v1193, %v1153
        %v1202 = vpack.c.b16 %v1194, %v1154
        %v1203 = vpack.c.b16 %v1195, %v1155
        %v1204 = vpack.c.b16 %v1196, %v1156
        %v1205 = vpack.c.b16 %v1197, %v1157
        %v1206 = vpack.c.b16 %v1198, %v1158
        %v1207 = vpack.c.b16 %v1199, %v1159
        %v1209 = vshrl.u32 %v1200, 16
        %v1211 = vshll.u32 %v1200, 16
        %v1213 = vrot.slane %v1211, 1
        %v1214 = vor.u32 %v1209, %v1213
        %v1216 = vshrl.u32 %v1201, 16
        %v1218 = vshll.u32 %v1201, 16
        %v1220 = vrot.slane %v1218, 1
        %v1221 = vor.u32 %v1216, %v1220
        %v1223 = vshrl.u32 %v1202, 16
        %v1225 = vshll.u32 %v1202, 16
        %v1227 = vrot.slane %v1225, 1
        %v1228 = vor.u32 %v1223, %v1227
        %v1230 = vshrl.u32 %v1203, 16
        %v1232 = vshll.u32 %v1203, 16
        %v1234 = vrot.slane %v1232, 1
        %v1235 = vor.u32 %v1230, %v1234
        %v1237 = vshrl.u32 %v1204, 16
        %v1239 = vshll.u32 %v1204, 16
        %v1241 = vrot.slane %v1239, 1
        %v1242 = vor.u32 %v1237, %v1241
        %v1244 = vshrl.u32 %v1205, 16
        %v1246 = vshll.u32 %v1205, 16
        %v1248 = vrot.slane %v1246, 1
        %v1249 = vor.u32 %v1244, %v1248
        %v1251 = vshrl.u32 %v1206, 16
        %v1253 = vshll.u32 %v1206, 16
        %v1255 = vrot.slane %v1253, 1
        %v1256 = vor.u32 %v1251, %v1255
        %v1258 = vshrl.u32 %v1207, 16
        %v1260 = vshll.u32 %v1207, 16
        %v1262 = vrot.slane %v1260, 1
        %v1263 = vor.u32 %v1258, %v1262
        %1264 = vrot.lane.b32.xlu0 %v1214, 80
        %v1265 = vpop.permute.xlu0 %1264
        %1266 = vrot.lane.b32.xlu0 %v1221, 80
        %v1267 = vpop.permute.xlu0 %1266
        %1268 = vrot.lane.b32.xlu0 %v1228, 80
        %v1269 = vpop.permute.xlu0 %1268
        %1270 = vrot.lane.b32.xlu0 %v1235, 80
        %v1271 = vpop.permute.xlu0 %1270
        %1272 = vrot.lane.b32.xlu0 %v1242, 80
        %v1273 = vpop.permute.xlu0 %1272
        %1274 = vrot.lane.b32.xlu0 %v1249, 80
        %v1275 = vpop.permute.xlu0 %1274
        %1276 = vrot.lane.b32.xlu0 %v1256, 80
        %v1277 = vpop.permute.xlu0 %1276
        %1278 = vrot.lane.b32.xlu0 %v1263, 80
        %v1279 = vpop.permute.xlu0 %1278
        %v1288 = vunpack.c.l.b16 %v312
        %v1289 = vunpack.c.l.b16 %v313
        %v1290 = vunpack.c.l.b16 %v314
        %v1291 = vunpack.c.l.b16 %v315
        %v1292 = vunpack.c.l.b16 %v316
        %v1293 = vunpack.c.l.b16 %v317
        %v1294 = vunpack.c.l.b16 %v318
        %v1295 = vunpack.c.l.b16 %v319
        %v1296 = vpack.c.b16 %v1192, %v1288
        %v1297 = vpack.c.b16 %v1193, %v1289
        %v1298 = vpack.c.b16 %v1194, %v1290
        %v1299 = vpack.c.b16 %v1195, %v1291
        %v1300 = vpack.c.b16 %v1196, %v1292
        %v1301 = vpack.c.b16 %v1197, %v1293
        %v1302 = vpack.c.b16 %v1198, %v1294
        %v1303 = vpack.c.b16 %v1199, %v1295
        %v1304 = vrot.slane %v1296, 1
        %v1305 = vrot.slane %v1297, 1
        %v1306 = vrot.slane %v1298, 1
        %v1307 = vrot.slane %v1299, 1
        %v1308 = vrot.slane %v1300, 1
        %v1309 = vrot.slane %v1301, 1
        %v1310 = vrot.slane %v1302, 1
        %v1311 = vrot.slane %v1303, 1
        %1312 = vrot.lane.b32.xlu0 %v1304, 96
        %v1313 = vpop.permute.xlu0 %1312
        %1314 = vrot.lane.b32.xlu0 %v1305, 96
        %v1315 = vpop.permute.xlu0 %1314
        %1316 = vrot.lane.b32.xlu0 %v1306, 96
        %v1317 = vpop.permute.xlu0 %1316
        %1318 = vrot.lane.b32.xlu0 %v1307, 96
        %v1319 = vpop.permute.xlu0 %1318
        %1320 = vrot.lane.b32.xlu0 %v1308, 96
        %v1321 = vpop.permute.xlu0 %1320
        %1322 = vrot.lane.b32.xlu0 %v1309, 96
        %v1323 = vpop.permute.xlu0 %1322
        %1324 = vrot.lane.b32.xlu0 %v1310, 96
        %v1325 = vpop.permute.xlu0 %1324
        %1326 = vrot.lane.b32.xlu0 %v1311, 96
        %v1327 = vpop.permute.xlu0 %1326
        %v1336 = vunpack.c.l.b16 %v320
        %v1337 = vunpack.c.l.b16 %v321
        %v1338 = vunpack.c.l.b16 %v322
        %v1339 = vunpack.c.l.b16 %v323
        %v1340 = vunpack.c.l.b16 %v324
        %v1341 = vunpack.c.l.b16 %v325
        %v1342 = vunpack.c.l.b16 %v326
        %v1343 = vunpack.c.l.b16 %v327
        %v1344 = vpack.c.b16 %v1336, %v1288
        %v1345 = vpack.c.b16 %v1337, %v1289
        %v1346 = vpack.c.b16 %v1338, %v1290
        %v1347 = vpack.c.b16 %v1339, %v1291
        %v1348 = vpack.c.b16 %v1340, %v1292
        %v1349 = vpack.c.b16 %v1341, %v1293
        %v1350 = vpack.c.b16 %v1342, %v1294
        %v1351 = vpack.c.b16 %v1343, %v1295
        %v1353 = vshrl.u32 %v1344, 16
        %v1355 = vrot.slane %v1353, 1
        %v1356 = vshll.u32 %v1344, 16
        %v1358 = vrot.slane %v1356, 2
        %v1359 = vor.u32 %v1355, %v1358
        %v1361 = vshrl.u32 %v1345, 16
        %v1363 = vrot.slane %v1361, 1
        %v1364 = vshll.u32 %v1345, 16
        %v1366 = vrot.slane %v1364, 2
        %v1367 = vor.u32 %v1363, %v1366
        %v1369 = vshrl.u32 %v1346, 16
        %v1371 = vrot.slane %v1369, 1
        %v1372 = vshll.u32 %v1346, 16
        %v1374 = vrot.slane %v1372, 2
        %v1375 = vor.u32 %v1371, %v1374
        %v1377 = vshrl.u32 %v1347, 16
        %v1379 = vrot.slane %v1377, 1
        %v1380 = vshll.u32 %v1347, 16
        %v1382 = vrot.slane %v1380, 2
        %v1383 = vor.u32 %v1379, %v1382
        %v1385 = vshrl.u32 %v1348, 16
        %v1387 = vrot.slane %v1385, 1
        %v1388 = vshll.u32 %v1348, 16
        %v1390 = vrot.slane %v1388, 2
        %v1391 = vor.u32 %v1387, %v1390
        %v1393 = vshrl.u32 %v1349, 16
        %v1395 = vrot.slane %v1393, 1
        %v1396 = vshll.u32 %v1349, 16
        %v1398 = vrot.slane %v1396, 2
        %v1399 = vor.u32 %v1395, %v1398
        %v1401 = vshrl.u32 %v1350, 16
        %v1403 = vrot.slane %v1401, 1
        %v1404 = vshll.u32 %v1350, 16
        %v1406 = vrot.slane %v1404, 2
        %v1407 = vor.u32 %v1403, %v1406
        %v1409 = vshrl.u32 %v1351, 16
        %v1411 = vrot.slane %v1409, 1
        %v1412 = vshll.u32 %v1351, 16
        %v1414 = vrot.slane %v1412, 2
        %v1415 = vor.u32 %v1411, %v1414
        %1416 = vrot.lane.b32.xlu0 %v1359, 112
        %v1417 = vpop.permute.xlu0 %1416
        %1418 = vrot.lane.b32.xlu0 %v1367, 112
        %v1419 = vpop.permute.xlu0 %1418
        %1420 = vrot.lane.b32.xlu0 %v1375, 112
        %v1421 = vpop.permute.xlu0 %1420
        %1422 = vrot.lane.b32.xlu0 %v1383, 112
        %v1423 = vpop.permute.xlu0 %1422
        %1424 = vrot.lane.b32.xlu0 %v1391, 112
        %v1425 = vpop.permute.xlu0 %1424
        %1426 = vrot.lane.b32.xlu0 %v1399, 112
        %v1427 = vpop.permute.xlu0 %1426
        %1428 = vrot.lane.b32.xlu0 %v1407, 112
        %v1429 = vpop.permute.xlu0 %1428
        %1430 = vrot.lane.b32.xlu0 %v1415, 112
        %v1431 = vpop.permute.xlu0 %1430
        %vm1432 = vcmask 130048
        %v1435 = vsel %vm1432, %v197, %v425
        %v1438 = vsel %vm1432, %v198, %v427
        %v1441 = vsel %vm1432, %v199, %v429
        %v1444 = vsel %vm1432, %v200, %v431
        %v1447 = vsel %vm1432, %v201, %v433
        %v1450 = vsel %vm1432, %v202, %v435
        %v1453 = vsel %vm1432, %v203, %v437
        %v1456 = vsel %vm1432, %v204, %v439
        %vm1457 = vcmask 261120
        %v1459 = vsel %vm1457, %v1435, %v473
        %v1461 = vsel %vm1457, %v1438, %v475
        %v1463 = vsel %vm1457, %v1441, %v477
        %v1465 = vsel %vm1457, %v1444, %v479
        %v1467 = vsel %vm1457, %v1447, %v481
        %v1469 = vsel %vm1457, %v1450, %v483
        %v1471 = vsel %vm1457, %v1453, %v485
        %v1473 = vsel %vm1457, %v1456, %v487
        %vm1474 = vcmask 392192
        %v1476 = vsel %vm1474, %v1459, %v577
        %v1478 = vsel %vm1474, %v1461, %v579
        %v1480 = vsel %vm1474, %v1463, %v581
        %v1482 = vsel %vm1474, %v1465, %v583
        %v1484 = vsel %vm1474, %v1467, %v585
        %v1486 = vsel %vm1474, %v1469, %v587
        %v1488 = vsel %vm1474, %v1471, %v589
        %v1490 = vsel %vm1474, %v1473, %v591
        %vm1491 = vcmask 523264
        %v1493 = vsel %vm1491, %v1476, %v617
        %v1495 = vsel %vm1491, %v1478, %v619
        %v1497 = vsel %vm1491, %v1480, %v621
        %v1499 = vsel %vm1491, %v1482, %v623
        %v1501 = vsel %vm1491, %v1484, %v625
        %v1503 = vsel %vm1491, %v1486, %v627
        %v1505 = vsel %vm1491, %v1488, %v629
        %v1507 = vsel %vm1491, %v1490, %v631
        %vm1508 = vcmask 654336
        %v1510 = vsel %vm1508, %v1493, %v713
        %v1512 = vsel %vm1508, %v1495, %v715
        %v1514 = vsel %vm1508, %v1497, %v717
        %v1516 = vsel %vm1508, %v1499, %v719
        %v1518 = vsel %vm1508, %v1501, %v721
        %v1520 = vsel %vm1508, %v1503, %v723
        %v1522 = vsel %vm1508, %v1505, %v725
        %v1524 = vsel %vm1508, %v1507, %v727
        %vm1525 = vcmask 785408
        %v1527 = vsel %vm1525, %v1510, %v761
        %v1529 = vsel %vm1525, %v1512, %v763
        %v1531 = vsel %vm1525, %v1514, %v765
        %v1533 = vsel %vm1525, %v1516, %v767
        %v1535 = vsel %vm1525, %v1518, %v769
        %v1537 = vsel %vm1525, %v1520, %v771
        %v1539 = vsel %vm1525, %v1522, %v773
        %v1541 = vsel %vm1525, %v1524, %v775
        %vm1542 = vcmask 916480
        %v1544 = vsel %vm1542, %v1527, %v865
        %v1546 = vsel %vm1542, %v1529, %v867
        %v1548 = vsel %vm1542, %v1531, %v869
        %v1550 = vsel %vm1542, %v1533, %v871
        %v1552 = vsel %vm1542, %v1535, %v873
        %v1554 = vsel %vm1542, %v1537, %v875
        %v1556 = vsel %vm1542, %v1539, %v877
        %v1558 = vsel %vm1542, %v1541, %v879
        %v1561 = vsel %vm1432, %v263, %v977
        %v1564 = vsel %vm1432, %v264, %v979
        %v1567 = vsel %vm1432, %v265, %v981
        %v1570 = vsel %vm1432, %v266, %v983
        %v1573 = vsel %vm1432, %v267, %v985
        %v1576 = vsel %vm1432, %v268, %v987
        %v1579 = vsel %vm1432, %v269, %v989
        %v1582 = vsel %vm1432, %v270, %v991
        %v1584 = vsel %vm1457, %v1561, %v1025
        %v1586 = vsel %vm1457, %v1564, %v1027
        %v1588 = vsel %vm1457, %v1567, %v1029
        %v1590 = vsel %vm1457, %v1570, %v1031
        %v1592 = vsel %vm1457, %v1573, %v1033
        %v1594 = vsel %vm1457, %v1576, %v1035
        %v1596 = vsel %vm1457, %v1579, %v1037
        %v1598 = vsel %vm1457, %v1582, %v1039
        %v1600 = vsel %vm1474, %v1584, %v1129
        %v1602 = vsel %vm1474, %v1586, %v1131
        %v1604 = vsel %vm1474, %v1588, %v1133
        %v1606 = vsel %vm1474, %v1590, %v1135
        %v1608 = vsel %vm1474, %v1592, %v1137
        %v1610 = vsel %vm1474, %v1594, %v1139
        %v1612 = vsel %vm1474, %v1596, %v1141
        %v1614 = vsel %vm1474, %v1598, %v1143
        %v1616 = vsel %vm1491, %v1600, %v1169
        %v1618 = vsel %vm1491, %v1602, %v1171
        %v1620 = vsel %vm1491, %v1604, %v1173
        %v1622 = vsel %vm1491, %v1606, %v1175
        %v1624 = vsel %vm1491, %v1608, %v1177
        %v1626 = vsel %vm1491, %v1610, %v1179
        %v1628 = vsel %vm1491, %v1612, %v1181
        %v1630 = vsel %vm1491, %v1614, %v1183
        %v1632 = vsel %vm1508, %v1616, %v1265
        %v1634 = vsel %vm1508, %v1618, %v1267
        %v1636 = vsel %vm1508, %v1620, %v1269
        %v1638 = vsel %vm1508, %v1622, %v1271
        %v1640 = vsel %vm1508, %v1624, %v1273
        %v1642 = vsel %vm1508, %v1626, %v1275
        %v1644 = vsel %vm1508, %v1628, %v1277
        %v1646 = vsel %vm1508, %v1630, %v1279
        %v1648 = vsel %vm1525, %v1632, %v1313
        %v1650 = vsel %vm1525, %v1634, %v1315
        %v1652 = vsel %vm1525, %v1636, %v1317
        %v1654 = vsel %vm1525, %v1638, %v1319
        %v1656 = vsel %vm1525, %v1640, %v1321
        %v1658 = vsel %vm1525, %v1642, %v1323
        %v1660 = vsel %vm1525, %v1644, %v1325
        %v1662 = vsel %vm1525, %v1646, %v1327
        %v1664 = vsel %vm1542, %v1648, %v1417
        %v1666 = vsel %vm1542, %v1650, %v1419
        %v1668 = vsel %vm1542, %v1652, %v1421
        %v1670 = vsel %vm1542, %v1654, %v1423
        %v1672 = vsel %vm1542, %v1656, %v1425
        %v1674 = vsel %vm1542, %v1658, %v1427
        %v1676 = vsel %vm1542, %v1660, %v1429
        %v1678 = vsel %vm1542, %v1662, %v1431
        %v1695 = vunpack.c.l.b16 %v1544
        %v1696 = vunpack.c.l.b16 %v1664
        %v1697 = vunpack.c.l.b16 %v1546
        %v1698 = vunpack.c.l.b16 %v1666
        %v1699 = vunpack.c.l.b16 %v1548
        %v1700 = vunpack.c.l.b16 %v1668
        %v1701 = vunpack.c.l.b16 %v1550
        %v1702 = vunpack.c.l.b16 %v1670
        %v1703 = vunpack.c.l.b16 %v1552
        %v1704 = vunpack.c.l.b16 %v1672
        %v1705 = vunpack.c.l.b16 %v1554
        %v1706 = vunpack.c.l.b16 %v1674
        %v1707 = vunpack.c.l.b16 %v1556
        %v1708 = vunpack.c.l.b16 %v1676
        %v1709 = vunpack.c.l.b16 %v1558
        %v1710 = vunpack.c.l.b16 %v1678
        %v1711 = vld [vmem:[%s1] sm:$0xf]
        %v1712 = vld [vmem:[%s1 + $0x4] sm:$0xf]
        %v1713 = vld [vmem:[%s1 + $0x8] sm:$0xf]
        %v1714 = vld [vmem:[%s1 + $0xc] sm:$0xf]
        %v1715 = vld [vmem:[%s1 + $0x10] sm:$0xf]
        %v1716 = vld [vmem:[%s1 + $0x14] sm:$0xf]
        %v1717 = vld [vmem:[%s1 + $0x18] sm:$0xf]
        %v1718 = vld [vmem:[%s1 + $0x1c] sm:$0xf]
        %v1719 = vld [vmem:[%s1 + $0x20] sm:$0xf]
        %v1720 = vld [vmem:[%s1 + $0x24] sm:$0xf]
        %v1721 = vld [vmem:[%s1 + $0x28] sm:$0xf]
        %v1722 = vld [vmem:[%s1 + $0x2c] sm:$0xf]
        %v1723 = vld [vmem:[%s1 + $0x30] sm:$0xf]
        %v1724 = vld [vmem:[%s1 + $0x34] sm:$0xf]
        %v1725 = vld [vmem:[%s1 + $0x38] sm:$0xf]
        %v1726 = vld [vmem:[%s1 + $0x3c] sm:$0xf]
        %v1727 = vld [vmem:[%s1 + $0x40] sm:$0xf]
        %v1728 = vld [vmem:[%s1 + $0x44] sm:$0xf]
        %v1729 = vld [vmem:[%s1 + $0x48] sm:$0xf]
        %v1730 = vld [vmem:[%s1 + $0x4c] sm:$0xf]
        %v1731 = vld [vmem:[%s1 + $0x50] sm:$0xf]
        %v1732 = vld [vmem:[%s1 + $0x54] sm:$0xf]
        %v1733 = vld [vmem:[%s1 + $0x58] sm:$0xf]
        %v1734 = vld [vmem:[%s1 + $0x5c] sm:$0xf]
        %v1735 = vld [vmem:[%s1 + $0x60] sm:$0xf]
        %v1736 = vld [vmem:[%s1 + $0x64] sm:$0xf]
        %v1737 = vld [vmem:[%s1 + $0x68] sm:$0xf]
        %v1738 = vld [vmem:[%s1 + $0x6c] sm:$0xf]
        %v1739 = vld [vmem:[%s1 + $0x70] sm:$0xf]
        %v1740 = vld [vmem:[%s1 + $0x74] sm:$0xf]
        %v1741 = vld [vmem:[%s1 + $0x78] sm:$0xf]
        %v1742 = vld [vmem:[%s1 + $0x7c] sm:$0xf]
        %v1743 = vpack.c.b16 %v1697, %v1695
        %v1744 = vpack.c.b16 %v1698, %v1696
        %v1745 = vpack.c.b16 %v1701, %v1699
        %v1746 = vpack.c.b16 %v1702, %v1700
        %v1747 = vpack.c.b16 %v1705, %v1703
        %v1748 = vpack.c.b16 %v1706, %v1704
        %v1749 = vpack.c.b16 %v1709, %v1707
        %v1750 = vpack.c.b16 %v1710, %v1708
        %v1791 = vunpack.c.l.b16 %v1711
        %v1792 = vunpack.c.l.b16 %v1712
        %v1793 = vunpack.c.l.b16 %v1713
        %v1794 = vunpack.c.l.b16 %v1714
        %v1795 = vunpack.c.l.b16 %v1715
        %v1796 = vunpack.c.l.b16 %v1716
        %v1797 = vunpack.c.l.b16 %v1717
        %v1798 = vunpack.c.l.b16 %v1718
        %v1799 = vunpack.c.l.b16 %v1719
        %v1800 = vunpack.c.l.b16 %v1720
        %v1801 = vunpack.c.l.b16 %v1721
        %v1802 = vunpack.c.l.b16 %v1722
        %v1803 = vunpack.c.l.b16 %v1723
        %v1804 = vunpack.c.l.b16 %v1724
        %v1805 = vunpack.c.l.b16 %v1725
        %v1806 = vunpack.c.l.b16 %v1726
        %v1807 = vunpack.c.l.b16 %v1727
        %v1808 = vunpack.c.l.b16 %v1728
        %v1809 = vunpack.c.l.b16 %v1729
        %v1810 = vunpack.c.l.b16 %v1730
        %v1811 = vunpack.c.l.b16 %v1731
        %v1812 = vunpack.c.l.b16 %v1732
        %v1813 = vunpack.c.l.b16 %v1733
        %v1814 = vunpack.c.l.b16 %v1734
        %v1815 = vunpack.c.l.b16 %v1735
        %v1816 = vunpack.c.l.b16 %v1736
        %v1817 = vunpack.c.l.b16 %v1737
        %v1818 = vunpack.c.l.b16 %v1738
        %v1819 = vunpack.c.l.b16 %v1739
        %v1820 = vunpack.c.l.b16 %v1740
        %v1821 = vunpack.c.l.b16 %v1741
        %v1822 = vunpack.c.l.b16 %v1742
        %v1823 = vpack.c.b16 %v1792, %v1791
        %v1824 = vpack.c.b16 %v1794, %v1793
        %v1825 = vpack.c.b16 %v1796, %v1795
        %v1826 = vpack.c.b16 %v1798, %v1797
        %v1827 = vpack.c.b16 %v1800, %v1799
        %v1828 = vpack.c.b16 %v1802, %v1801
        %v1829 = vpack.c.b16 %v1804, %v1803
        %v1830 = vpack.c.b16 %v1806, %v1805
        %v1831 = vpack.c.b16 %v1808, %v1807
        %v1832 = vpack.c.b16 %v1810, %v1809
        %v1833 = vpack.c.b16 %v1812, %v1811
        %v1834 = vpack.c.b16 %v1814, %v1813
        %v1835 = vpack.c.b16 %v1816, %v1815
        %v1836 = vpack.c.b16 %v1818, %v1817
        %v1837 = vpack.c.b16 %v1820, %v1819
        %v1838 = vpack.c.b16 %v1822, %v1821
        %1855 = vmatprep.subr.bf16.mxu0 0
        %1856 = vmatpush1.bf16.msra.mxu0 %v1823
        %1857 = vmatprep.subr.bf16.mxu0 0
        %1858 = vmatpush1.bf16.msra.mxu0 %v1824
        %1859 = vmatprep.subr.bf16.mxu0 0
        %1860 = vmatpush1.bf16.msra.mxu0 %v1825
        %1861 = vmatprep.subr.bf16.mxu0 0
        %1862 = vmatpush1.bf16.msra.mxu0 %v1826
        %1863 = vmatprep.subr.bf16.mxu0 0
        %1864 = vmatpush1.bf16.msra.mxu0 %v1827
        %1865 = vmatprep.subr.bf16.mxu0 0
        %1866 = vmatpush1.bf16.msra.mxu0 %v1828
        %1867 = vmatprep.subr.bf16.mxu0 0
        %1868 = vmatpush1.bf16.msra.mxu0 %v1829
        %1869 = vmatprep.subr.bf16.mxu0 0
        %1870 = vmatpush1.bf16.msra.mxu0 %v1830
        %1871 = vmatprep.subr.bf16.mxu0 0
        %1872 = vmatpush1.bf16.msra.mxu0 %v1831
        %1873 = vmatprep.subr.bf16.mxu0 0
        %1874 = vmatpush1.bf16.msra.mxu0 %v1832
        %1875 = vmatprep.subr.bf16.mxu0 0
        %1876 = vmatpush1.bf16.msra.mxu0 %v1833
        %1877 = vmatprep.subr.bf16.mxu0 0
        %1878 = vmatpush1.bf16.msra.mxu0 %v1834
        %1879 = vmatprep.subr.bf16.mxu0 0
        %1880 = vmatpush1.bf16.msra.mxu0 %v1835
        %1881 = vmatprep.subr.bf16.mxu0 0
        %1882 = vmatpush1.bf16.msra.mxu0 %v1836
        %1883 = vmatprep.subr.bf16.mxu0 0
        %1884 = vmatpush1.bf16.msra.mxu0 %v1837
        %1885 = vmatprep.subr.bf16.mxu0 0
        %1886 = vmatpush1.bf16.msra.mxu0 %v1838
        %1887 = vmatprep.mubr.bf16.mxu0 %v1744
        %1888 = vmatmul.mubr.bf16.gmra.mrb[0].mxu0 %v1743
        %v1889 = vpop.f32.mrb[0].mxu0
        %v1890 = vadd.f32 0.0, %v1889
        %v1891 = vpop.f32.mrb[0].mxu0
        %v1892 = vpop.f32.mrb[0].mxu0
        %v1893 = vadd.f32 0.0, %v1892
        %v1894 = vpop.f32.mrb[0].mxu0
        %1895 = vmatprep.mubr.bf16.mxu0 %v1746
        %1896 = vmatmul.mubr.bf16.gmra.mrb[0].mxu0 %v1745
        %v1897 = vpop.f32.mrb[0].mxu0
        %v1898 = vadd.f32 0.0, %v1897
        %v1899 = vpop.f32.mrb[0].mxu0
        %v1900 = vpop.f32.mrb[0].mxu0
        %v1901 = vadd.f32 0.0, %v1900
        %v1902 = vpop.f32.mrb[0].mxu0
        %1903 = vmatprep.mubr.bf16.mxu0 %v1748
        %1904 = vmatmul.mubr.bf16.gmra.mrb[0].mxu0 %v1747
        %v1905 = vpop.f32.mrb[0].mxu0
        %v1906 = vadd.f32 0.0, %v1905
        %v1907 = vpop.f32.mrb[0].mxu0
        %v1908 = vpop.f32.mrb[0].mxu0
        %v1909 = vadd.f32 0.0, %v1908
        %v1910 = vpop.f32.mrb[0].mxu0
        %1911 = vmatprep.mubr.bf16.mxu0 %v1750
        %1912 = vmatmul.mubr.bf16.gmra.mrb[0].mxu0 %v1749
        %v1913 = vpop.f32.mrb[0].mxu0
        %v1914 = vadd.f32 0.0, %v1913
        %v1915 = vpop.f32.mrb[0].mxu0
        %v1916 = vpop.f32.mrb[0].mxu0
        %v1917 = vadd.f32 0.0, %v1916
        %v1918 = vpop.f32.mrb[0].mxu0
        %1919 = vdwg.mxu0
        %v1920 = vld [vmem:[%s2] sm:$0x1]
        %v1922 = vlaneseq
        %v1923 = vshrl.u32 %v1922, 7
        %v1924 = vsub.s32 0, %v1923
        %v1925 = vrot.slane %v1920, %v1924
        %v1927 = vmul.f32 %v1890, %v1925
        %v1928 = vmul.f32 %v1893, %v1925
        %v1929 = vmul.f32 %v1898, %v1925
        %v1930 = vmul.f32 %v1901, %v1925
        %v1931 = vmul.f32 %v1906, %v1925
        %v1932 = vmul.f32 %v1909, %v1925
        %v1933 = vmul.f32 %v1914, %v1925
        %v1934 = vmul.f32 %v1917, %v1925
        %v1935 = vld [vmem:[%s3] sm:$0x1]
        %v1937 = vlaneseq
        %v1938 = vshrl.u32 %v1937, 7
        %v1939 = vsub.s32 0, %v1938
        %v1940 = vrot.slane %v1935, %v1939
        %v1942 = vadd.f32 %v1927, %v1940
        %v1943 = vadd.f32 %v1928, %v1940
        %v1944 = vadd.f32 %v1929, %v1940
        %v1945 = vadd.f32 %v1930, %v1940
        %v1946 = vadd.f32 %v1931, %v1940
        %v1947 = vadd.f32 %v1932, %v1940
        %v1948 = vadd.f32 %v1933, %v1940
        %v1949 = vadd.f32 %v1934, %v1940
        %v1950 = vmax.f32 %v1942, 0.0
        %v1951 = vmax.f32 %v1943, 0.0
        %v1952 = vmax.f32 %v1944, 0.0
        %v1953 = vmax.f32 %v1945, 0.0
        %v1954 = vmax.f32 %v1946, 0.0
        %v1955 = vmax.f32 %v1947, 0.0
        %v1956 = vmax.f32 %v1948, 0.0
        %v1957 = vmax.f32 %v1949, 0.0
        %v1958 = vmax.f32 %v1950, %v1951
        %v1959 = vmax.f32 %v1952, %v1953
        %v1960 = vmax.f32 %v1954, %v1955
        %v1961 = vmax.f32 %v1956, %v1957
        %v1962 = vmax.f32 %v1958, 0.0
        %v1963 = vmax.f32 %v1959, %v1951
        %v1964 = vmax.f32 %v1960, %v1953
        %v1965 = vmax.f32 %v1961, %v1955
        %vm1966 = vcmask 516096
        %1967 = vst.msk [vmem:[#allocation2] sm:$0x1] %vm1966, 0.0
        %1968 = vst.msk [vmem:[#allocation2 + $0x10] sm:$0x1] %vm1966, 0.0
        %1969 = vst.msk [vmem:[#allocation2 + $0x20] sm:$0x1] %vm1966, 0.0
        %1970 = vst.msk [vmem:[#allocation2 + $0x30] sm:$0x1] %vm1966, 0.0
        %1971 = vst.msk [vmem:[#allocation2 + $0x1] sm:$0xff] %vm1491, %v1962
        %1972 = vst.msk [vmem:[#allocation2 + $0x11] sm:$0xff] %vm1491, %v1963
        %1973 = vst.msk [vmem:[#allocation2 + $0x21] sm:$0xff] %vm1491, %v1964
        %1974 = vst.msk [vmem:[#allocation2 + $0x31] sm:$0xff] %vm1491, %v1965
        %v1975 = vld [vmem:[#allocation2] ss:$2 sm:$0xf]
        %s1976 = scalar_lea.vmem [#allocation2], 16
        %v1977 = vld [vmem:[%s1976] ss:$2 sm:$0xf]
        %s1978 = scalar_lea.vmem [#allocation2], 32
        %v1979 = vld [vmem:[%s1978] ss:$2 sm:$0xf]
        %s1980 = scalar_lea.vmem [#allocation2], 48
        %v1981 = vld [vmem:[%s1980] ss:$2 sm:$0xf]
        %s1982 = scalar_lea.vmem [#allocation2], 1
        %v1983 = vld [vmem:[%s1982] ss:$2 sm:$0xf]
        %s1984 = scalar_lea.vmem [#allocation2], 17
        %v1985 = vld [vmem:[%s1984] ss:$2 sm:$0xf]
        %s1986 = scalar_lea.vmem [#allocation2], 33
        %v1987 = vld [vmem:[%s1986] ss:$2 sm:$0xf]
        %s1988 = scalar_lea.vmem [#allocation2], 49
        %v1989 = vld [vmem:[%s1988] ss:$2 sm:$0xf]
        %v1990 = vmax.f32 %v1975, %v1983
        %v1991 = vmax.f32 %v1977, %v1985
        %v1992 = vmax.f32 %v1979, %v1987
        %v1993 = vmax.f32 %v1981, %v1989
        %s1994 = scalar_lea.vmem [#allocation2], 2
        %v1995 = vld [vmem:[%s1994] ss:$2 sm:$0xf]
        %s1996 = scalar_lea.vmem [#allocation2], 18
        %v1997 = vld [vmem:[%s1996] ss:$2 sm:$0xf]
        %s1998 = scalar_lea.vmem [#allocation2], 34
        %v1999 = vld [vmem:[%s1998] ss:$2 sm:$0xf]
        %s2000 = scalar_lea.vmem [#allocation2], 50
        %v2001 = vld [vmem:[%s2000] ss:$2 sm:$0xf]
        %v2002 = vmax.f32 %v1990, %v1995
        %v2003 = vmax.f32 %v1991, %v1997
        %v2004 = vmax.f32 %v1992, %v1999
        %v2005 = vmax.f32 %v1993, %v2001
        %vm2006 = vcmask 519168
        %2007 = vst.msk [vmem:[%s190] sm:$0xf] %vm2006, %v2002
        %2008 = vst.msk [vmem:[%s190 + $0x4] sm:$0xf] %vm2006, %v2003
        %2009 = vst.msk [vmem:[%s190 + $0x8] sm:$0xf] %vm2006, %v2004
        %2010 = vst.msk [vmem:[%s190 + $0xc] sm:$0xf] %vm2006, %v2005
        %s2011 = sand.u32 %s115, 1
        %s2012 = scalar_lea.sflag [#allocation4], %s2011
        %s2013 = sand.u32 %s115, 1
        %s2014 = smul.addr %s2013, 16
        %s2015 = scalar_lea.vmem [#allocation3], %s2014
        // Predicated region
        $region37: #{resnet_top_forward.1} parent=35 // pred_check
          %p2016 = pneg %p125
        $region38: #{resnet_top_forward.1} parent=35 // pred_check_branch
          %2018 = sbr.rel (%p2016) target = $region40
        $region39: #{resnet_top_forward.1} parent=35 // pred_region
          %s2020 = ssub.s32 256, 256
          %2021 = vsyncadd %s2012, %s2020
          %s2022 = smul.addr %s18, 4
          %s2023 = smul.addr %s2022, 64
          %s2024 = scalar_lea.hbm %s4, %s2023
          %s2025 = sshll.u32 %s2015, 4
          %s2026 = int_to_ptr.vmem [resolvable:$true] %s2025
          %2031 = dma.vmem_to_hbm [thread:$0]  %s2026, 256, %s2024, %s2012, 64, 64, 4
        $region40: #{resnet_top_forward.1} parent=35 // pred_fallthru
          _
      $region36: #{resnet_top_forward.1} parent=5 // pred_fallthru
        _
      %p2032 = scmp.le.s32.totalorder 2, %s13
      // Predicated region
      $region41: #{resnet_top_forward.1} parent=5 // pred_check
        %p2033 = pneg %p2032
      $region42: #{resnet_top_forward.1} parent=5 // pred_check_branch
        %2035 = sbr.rel (%p2033) target = $region44
      $region43: #{resnet_top_forward.1} parent=5 // pred_region
        %s2036 = ssub.s32 %s13, 2
        // Predicated region
        $region45: #{resnet_top_forward.1} parent=43 // pred_check
          %p2037 = pneg %p131
        $region46: #{resnet_top_forward.1} parent=43 // pred_check_branch
          %2039 = sbr.rel (%p2037) target = $region48
        $region47: #{resnet_top_forward.1} parent=43 // pred_region
          %s2040 = sand.u32 %s116, 1
          %s2041 = scalar_lea.sflag [#allocation4], %s2040
          %s2042 = sand.u32 %s116, 1
          %s2043 = smul.addr %s2042, 16
          %s2044 = scalar_lea.vmem [#allocation3], %s2043
          %2045 = dma.done %s2041, 256
        $region48: #{resnet_top_forward.1} parent=43 // pred_fallthru
          _
      $region44: #{resnet_top_forward.1} parent=5 // pred_fallthru
        _
    $region6: #{resnet_top_forward.1} parent=1 // loop_footer
      %s17 = sadd.s32 1, %s13
    $region7: #{resnet_top_forward.1} parent=1 // loop_footer_branch
      %12 = sbr.rel target = $region3
    $region8: #{resnet_top_forward.1} parent=1 // loop_exit
      _
    %2046 = vsyncpa [#allocation4], 1
    %s2047 = scalar_lea.sflag [#allocation4], 1
    %2048 = vsyncpa %s2047, 1

</llo_original>
